<compile_context>
chip_gen: v7x
topology: tpu7x:2x2x1
jax: 0.10.0
libtpu: 0.0.40
codegen_flags: <defaults>
</compile_context>

<pallas_src>
import functools
import math

import jax
import jax.numpy as jnp
from jax.experimental import pallas as pl
from jax.experimental.pallas import tpu as pltpu

BN_EPS = 1e-5


def _round_up(x, m):
    return ((x + m - 1) // m) * m


def _pick_tile(dim, candidates):
    """Pick a tile size (all candidates are multiples of 128) minimizing the
    padded extent, preferring the largest tile on ties."""
    best = None
    for c in candidates:
        padded = _round_up(dim, c)
        if best is None or padded < best[0] or (padded == best[0] and c > best[1]):
            best = (padded, c)
    return best[1]


def _full_spec(shape):
    nd = len(shape)
    return pl.BlockSpec(shape, lambda i: (0,) * nd)


# ----------------------------- Pallas kernels -----------------------------

def _mm_affine_kernel(x_ref, w_ref, s_ref, b_ref, o_ref, acc_ref, *, relu):
    k = pl.program_id(2)

    @pl.when(k == 0)
    def _():
        acc_ref[...] = jnp.zeros_like(acc_ref)

    acc_ref[...] += jnp.dot(x_ref[...], w_ref[...],
                            preferred_element_type=jnp.float32)

    @pl.when(k == pl.num_programs(2) - 1)
    def _():
        out = acc_ref[...] * s_ref[...] + b_ref[...]
        if relu:
            out = jnp.maximum(out, 0.0)
        o_ref[...] = out.astype(o_ref.dtype)


def _mm_affine_res_kernel(x_ref, w_ref, s_ref, b_ref, r_ref, o_ref, acc_ref, *, relu):
    k = pl.program_id(2)

    @pl.when(k == 0)
    def _():
        acc_ref[...] = jnp.zeros_like(acc_ref)

    acc_ref[...] += jnp.dot(x_ref[...], w_ref[...],
                            preferred_element_type=jnp.float32)

    @pl.when(k == pl.num_programs(2) - 1)
    def _():
        out = (acc_ref[...] * s_ref[...] + b_ref[...]
               + r_ref[...].astype(jnp.float32))
        if relu:
            out = jnp.maximum(out, 0.0)
        o_ref[...] = out.astype(o_ref.dtype)


def _maxpool_kernel(p_ref, o_ref):
    # f32 vector math (v5e VPU has no bf16 ALUs), bf16 store.
    o_ref[...] = jnp.max(p_ref[...].astype(jnp.float32), axis=1).astype(o_ref.dtype)


def _avgpool_fc_kernel(x_ref, w_ref, b_ref, o_ref, *, inv_s):
    pooled = jnp.sum(x_ref[...].astype(jnp.float32), axis=1) * inv_s     # (N, C)
    o_ref[...] = (jnp.dot(pooled, w_ref[...],
                          preferred_element_type=jnp.float32) + b_ref[...])


# --------------------------- kernel wrappers -------------------------------

def matmul_affine(x, w, scale, bias, *, relu, residual=None,
                  out_dtype=jnp.bfloat16):
    """maybe_relu((x @ w) * scale + bias [+ residual]).

    Tiled (M, N, K) grid with a f32 VMEM accumulator; bf16 inputs to the MXU,
    f32 epilogue on the last K step only; M/N/K padded to lane-dense tiles.
    """
    M, K = x.shape
    N = w.shape[1]
    tm = _pick_tile(M, (512, 384, 256, 128))
    tn = _pick_tile(N, (256, 128))
    tk = _pick_tile(K, (512, 384, 256, 128))
    Mp, Kp, Np = _round_up(M, tm), _round_up(K, tk), _round_up(N, tn)

    xp = jnp.pad(x.astype(jnp.bfloat16), ((0, Mp - M), (0, Kp - K)))
    wp = jnp.pad(w.astype(jnp.bfloat16), ((0, Kp - K), (0, Np - N)))
    sp = jnp.pad(scale.reshape(1, N).astype(jnp.float32), ((0, 0), (0, Np - N)))
    bp = jnp.pad(bias.reshape(1, N).astype(jnp.float32), ((0, 0), (0, Np - N)))

    grid = (Mp // tm, Np // tn, Kp // tk)
    in_specs = [
        pl.BlockSpec((tm, tk), lambda i, j, k: (i, k)),
        pl.BlockSpec((tk, tn), lambda i, j, k: (k, j)),
        pl.BlockSpec((1, tn), lambda i, j, k: (0, j)),
        pl.BlockSpec((1, tn), lambda i, j, k: (0, j)),
    ]
    operands = [xp, wp, sp, bp]
    out_bytes = Mp * Np * jnp.dtype(out_dtype).itemsize
    bytes_accessed = xp.size * 2 + wp.size * 2 + out_bytes

    if residual is None:
        kernel = functools.partial(_mm_affine_kernel, relu=relu)
    else:
        rp = jnp.pad(residual.astype(jnp.bfloat16), ((0, Mp - M), (0, Np - N)))
        in_specs.append(pl.BlockSpec((tm, tn), lambda i, j, k: (i, j)))
        operands.append(rp)
        bytes_accessed += rp.size * 2
        kernel = functools.partial(_mm_affine_res_kernel, relu=relu)

    out = pl.pallas_call(
        kernel,
        out_shape=jax.ShapeDtypeStruct((Mp, Np), out_dtype),
        grid_spec=pltpu.PrefetchScalarGridSpec(
            num_scalar_prefetch=0,
            grid=grid,
            in_specs=in_specs,
            out_specs=pl.BlockSpec((tm, tn), lambda i, j, k: (i, j)),
            scratch_shapes=[pltpu.VMEM((tm, tn), jnp.float32)],
        ),
        compiler_params=pltpu.CompilerParams(
            dimension_semantics=("parallel", "parallel", "arbitrary")),
        cost_estimate=pl.CostEstimate(flops=2 * Mp * Kp * Np,
                                      transcendentals=0,
                                      bytes_accessed=int(bytes_accessed)),
    )(*operands)
    return out[:M, :N]


def _im2col(x, ksize, stride, padding, pad_value=0.0, flatten_channels=True):
    """x: (N, D, H, W, C) -> patches (M, k^3*C) or (M, k^3, C); order (kd, kh, kw, C)."""
    N, D, H, W, C = x.shape
    xp = jnp.pad(x, ((0, 0), (padding, padding), (padding, padding),
                     (padding, padding), (0, 0)), constant_values=pad_value)
    Do = (D + 2 * padding - ksize) // stride + 1
    Ho = (H + 2 * padding - ksize) // stride + 1
    Wo = (W + 2 * padding - ksize) // stride + 1
    slices = []
    for kd in range(ksize):
        for kh in range(ksize):
            for kw in range(ksize):
                sl = xp[:, kd:kd + (Do - 1) * stride + 1:stride,
                        kh:kh + (Ho - 1) * stride + 1:stride,
                        kw:kw + (Wo - 1) * stride + 1:stride, :]
                slices.append(sl)
    patches = jnp.stack(slices, axis=4)  # (N, Do, Ho, Wo, k^3, C)
    M = N * Do * Ho * Wo
    if flatten_channels:
        patches = patches.reshape(M, ksize ** 3 * C)
    else:
        patches = patches.reshape(M, ksize ** 3, C)
    return patches, (N, Do, Ho, Wo)


def conv3d_bn(x, w, scale, bias, *, stride, padding, relu, residual=None):
    """Conv3d (no bias) + folded BatchNorm + optional residual + ReLU.
    x: (N, D, H, W, Cin) NDHWC bf16 ; w: (Cout, Cin, kd, kh, kw) PyTorch layout."""
    Cout, Cin, kd, kh, kw = w.shape
    patches, (N, Do, Ho, Wo) = _im2col(x, kd, stride, padding)
    wm = jnp.transpose(w, (2, 3, 4, 1, 0)).reshape(kd * kh * kw * Cin, Cout)
    res2d = None if residual is None else residual.reshape(-1, Cout)
    out = matmul_affine(patches, wm, scale, bias, relu=relu, residual=res2d,
                        out_dtype=jnp.bfloat16)
    return out.reshape(N, Do, Ho, Wo, Cout)


def maxpool3d(x, *, ksize, stride, padding):
    N, D, H, W, C = x.shape
    patches, (_, Do, Ho, Wo) = _im2col(x, ksize, stride, padding,
                                       pad_value=float("-inf"),
                                       flatten_channels=False)
    M = patches.shape[0]
    tm = _pick_tile(M, (512, 256, 128))
    Mp = _round_up(M, tm)
    pp = jnp.pad(patches, ((0, Mp - M), (0, 0), (0, 0)))
    out = pl.pallas_call(
        _maxpool_kernel,
        out_shape=jax.ShapeDtypeStruct((Mp, C), x.dtype),
        grid=(Mp // tm,),
        in_specs=[pl.BlockSpec((tm, ksize ** 3, C), lambda i: (i, 0, 0))],
        out_specs=pl.BlockSpec((tm, C), lambda i: (i, 0)),
        compiler_params=pltpu.CompilerParams(dimension_semantics=("parallel",)),
    )(pp)
    return out[:M].reshape(N, Do, Ho, Wo, C)


def avgpool_fc(x, fc_w, fc_b):
    """AdaptiveAvgPool3d(1) + flatten + Linear fused into one small kernel."""
    N, D, H, W, C = x.shape
    S = D * H * W
    xs = x.reshape(N, S, C)
    w = jnp.transpose(fc_w).astype(jnp.float32)          # (C, E)
    b = fc_b.reshape(1, -1).astype(jnp.float32)          # (1, E)
    E = w.shape[1]
    kern = functools.partial(_avgpool_fc_kernel, inv_s=1.0 / float(S))
    return pl.pallas_call(
        kern,
        out_shape=jax.ShapeDtypeStruct((N, E), jnp.float32),
        grid=(1,),
        in_specs=[_full_spec(xs.shape), _full_spec(w.shape), _full_spec(b.shape)],
        out_specs=_full_spec((N, E)),
        compiler_params=pltpu.CompilerParams(dimension_semantics=("arbitrary",)),
    )(xs, w, b)


# --------------------------- parameter init --------------------------------

def init_bn(c):
    # (gamma, beta, running_mean, running_var) — PyTorch defaults
    return (jnp.ones((c,), jnp.float32), jnp.zeros((c,), jnp.float32),
            jnp.zeros((c,), jnp.float32), jnp.ones((c,), jnp.float32))


def bn_affine(bn):
    gamma, beta, mean, var = bn
    scale = gamma / jnp.sqrt(var + BN_EPS)
    return scale, beta - mean * scale


def init_conv(key, cout, cin, k):
    # kaiming_normal_(mode='fan_out', nonlinearity='relu')
    fan_out = cout * k * k * k
    std = math.sqrt(2.0 / fan_out)
    return std * jax.random.normal(key, (cout, cin, k, k, k), jnp.float32)


def init_resnet_params(key, in_channels=1, layers=(1, 1, 1, 1), n_embedding=64):
    keys = iter(jax.random.split(key, 64))
    params = {}
    params["conv1_w"] = init_conv(next(keys), 64, in_channels, 7)
    params["bn1"] = init_bn(64)
    blocks = []
    inplanes = 64
    plan = [(64, 1), (128, 2), (256, 2), (512, 2)]
    for (planes, stride), nblocks in zip(plan, layers):
        for bi in range(nblocks):
            s = stride if bi == 0 else 1
            blk = {
                "stride": s,
                "conv1_w": init_conv(next(keys), planes, inplanes, 3),
                "bn1": init_bn(planes),
                "conv2_w": init_conv(next(keys), planes, planes, 3),
                "bn2": init_bn(planes),
            }
            if s != 1 or inplanes != planes:
                blk["down_w"] = init_conv(next(keys), planes, inplanes, 1)
                blk["down_bn"] = init_bn(planes)
            blocks.append(blk)
            inplanes = planes
    params["blocks"] = blocks
    # nn.Linear(512, n_embedding): weight ~ N(0, 0.01), bias = 0
    params["fc_w"] = 0.01 * jax.random.normal(next(keys), (n_embedding, 512), jnp.float32)
    params["fc_b"] = jnp.zeros((n_embedding,), jnp.float32)
    return params


# ------------------------------ forward ------------------------------------

def basic_block(x, blk):
    identity = x
    out = conv3d_bn(x, blk["conv1_w"], *bn_affine(blk["bn1"]),
                    stride=blk["stride"], padding=1, relu=True)
    if "down_w" in blk:
        identity = conv3d_bn(x, blk["down_w"], *bn_affine(blk["down_bn"]),
                             stride=blk["stride"], padding=0, relu=False)
    # conv2 + bn2 + residual add + relu (fused in one Pallas GEMM epilogue)
    out = conv3d_bn(out, blk["conv2_w"], *bn_affine(blk["bn2"]),
                    stride=1, padding=1, relu=True, residual=identity)
    return out


def resnet_forward(x_ncdhw, params):
    # NCDHW (PyTorch) -> NDHWC (kernel layout), bf16 activations between layers
    x = jnp.transpose(x_ncdhw, (0, 2, 3, 4, 1)).astype(jnp.bfloat16)
    # stem: conv7x7x7 s2 p3 + bn + relu, maxpool3 s2 p1
    x = conv3d_bn(x, params["conv1_w"], *bn_affine(params["bn1"]),
                  stride=2, padding=3, relu=True)
    x = maxpool3d(x, ksize=3, stride=2, padding=1)
    # layer1..layer4 (BasicBlock)
    for blk in params["blocks"]:
        x = basic_block(x, blk)
    # AdaptiveAvgPool3d(1) + flatten + nn.Linear(512, n_embedding), fused
    return avgpool_fc(x, params["fc_w"], params["fc_b"])


if __name__ == "__main__":
    key = jax.random.PRNGKey(0)
    kp, kx = jax.random.split(key)
    n_embedding = 64
    params = init_resnet_params(kp, in_channels=1, layers=(1, 1, 1, 1),
                                n_embedding=n_embedding)
    # PyTorch-style input: (batch, channels, depth, height, width)
    x = jax.random.normal(kx, (2, 1, 16, 16, 16), jnp.float32)
    emb = resnet_forward(x, params)
    jax.block_until_ready(emb)
    assert emb.shape == (2, n_embedding)
    assert bool(jnp.all(jnp.isfinite(emb)))
    print("KERNEL_OK")
</pallas_src>

<mosaic_0001>
module attributes {stable_mosaic.version = 11 : i64} {
  func.func @_mm_affine_kernel(%arg0: i32, %arg1: i32, %arg2: i32, %arg3: memref<512x384xbf16, #tpu.memory_space<vmem>>, %arg4: memref<384x128xbf16, #tpu.memory_space<vmem>>, %arg5: memref<1x128xf32, #tpu.memory_space<vmem>>, %arg6: memref<1x128xf32, #tpu.memory_space<vmem>>, %arg7: memref<512x128xbf16, #tpu.memory_space<vmem>>, %arg8: memref<512x128xf32, #tpu.memory_space<vmem>>) attributes {dimension_semantics = [#tpu.dimension_semantics<parallel>, #tpu.dimension_semantics<parallel>, #tpu.dimension_semantics<arbitrary>], iteration_bounds = array<i64: 2, 1, 1>, scalar_prefetch = 0 : i64, scratch_operands = 1 : i64, tpu.core_type = #tpu.core_type<tc>, window_params = [{transform_indices = @transform_0, window_bounds = array<i64: 512, 384>}, {transform_indices = @transform_1, window_bounds = array<i64: 384, 128>}, {transform_indices = @transform_2, window_bounds = array<i64: 1, 128>}, {transform_indices = @transform_3, window_bounds = array<i64: 1, 128>}, {transform_indices = @transform_4, window_bounds = array<i64: 512, 128>}]} {
    %c0_i32 = arith.constant 0 : i32
    %0 = arith.cmpi eq, %arg2, %c0_i32 : i32
    %1 = arith.extui %0 : i1 to i32
    %c0_i32_0 = arith.constant 0 : i32
    %2 = arith.cmpi ne, %1, %c0_i32_0 : i32
    scf.if %2 {
      %cst_10 = arith.constant 0.000000e+00 : f32
      %12 = vector.broadcast %cst_10 : f32 to vector<512x128xf32>
      %c0_11 = arith.constant 0 : index
      %c0_12 = arith.constant 0 : index
      %13 = vector.load %arg8[%c0_11, %c0_12] : memref<512x128xf32, #tpu.memory_space<vmem>>, vector<512x128xf32>
      tpu.vector_store %arg8[%c0_11, %c0_12], %12 {strides = array<i32>} : memref<512x128xf32, #tpu.memory_space<vmem>>, vector<512x128xf32>,
    } else {
    }
    %c0 = arith.constant 0 : index
    %c0_1 = arith.constant 0 : index
    %3 = vector.load %arg8[%c0, %c0_1] : memref<512x128xf32, #tpu.memory_space<vmem>>, vector<512x128xf32>
    %c0_2 = arith.constant 0 : index
    %c0_3 = arith.constant 0 : index
    %4 = vector.load %arg3[%c0_2, %c0_3] : memref<512x384xbf16, #tpu.memory_space<vmem>>, vector<512x384xbf16>
    %c0_4 = arith.constant 0 : index
    %c0_5 = arith.constant 0 : index
    %5 = vector.load %arg4[%c0_4, %c0_5] : memref<384x128xbf16, #tpu.memory_space<vmem>>, vector<384x128xbf16>
    %cst = arith.constant dense<0.000000e+00> : vector<512x128xf32>
    %6 = tpu.matmul %4, %5, %cst {dimension_numbers = #tpu.dot_dimension_numbers<[1], [0], [0], [1], [0, 0, 1, 1], [], []>} : vector<512x384xbf16>, vector<384x128xbf16>, vector<512x128xf32> -> vector<512x128xf32>
    %7 = arith.addf %3, %6 : vector<512x128xf32>
    %c0_6 = arith.constant 0 : index
    %c0_7 = arith.constant 0 : index
    %8 = vector.load %arg8[%c0_6, %c0_7] : memref<512x128xf32, #tpu.memory_space<vmem>>, vector<512x128xf32>
    tpu.vector_store %arg8[%c0_6, %c0_7], %7 {strides = array<i32>} : memref<512x128xf32, #tpu.memory_space<vmem>>, vector<512x128xf32>,
    %c0_i32_8 = arith.constant 0 : i32
    %9 = arith.cmpi eq, %arg2, %c0_i32_8 : i32
    %10 = arith.extui %9 : i1 to i32
    %c0_i32_9 = arith.constant 0 : i32
    %11 = arith.cmpi ne, %10, %c0_i32_9 : i32
    scf.if %11 {
      %c0_10 = arith.constant 0 : index
      %c0_11 = arith.constant 0 : index
      %12 = vector.load %arg8[%c0_10, %c0_11] : memref<512x128xf32, #tpu.memory_space<vmem>>, vector<512x128xf32>
      %c0_12 = arith.constant 0 : index
      %c0_13 = arith.constant 0 : index
      %13 = vector.load %arg5[%c0_12, %c0_13] : memref<1x128xf32, #tpu.memory_space<vmem>>, vector<1x128xf32>
      %14 = vector.broadcast %13 : vector<1x128xf32> to vector<512x128xf32>
      %15 = arith.mulf %12, %14 : vector<512x128xf32>
      %c0_14 = arith.constant 0 : index
      %c0_15 = arith.constant 0 : index
      %16 = vector.load %arg6[%c0_14, %c0_15] : memref<1x128xf32, #tpu.memory_space<vmem>>, vector<1x128xf32>
      %17 = vector.broadcast %16 : vector<1x128xf32> to vector<512x128xf32>
      %18 = arith.addf %15, %17 : vector<512x128xf32>
      %cst_16 = arith.constant 0.000000e+00 : f32
      %19 = vector.broadcast %cst_16 : f32 to vector<512x128xf32>
      %20 = arith.maximumf %18, %19 : vector<512x128xf32>
      %21 = arith.truncf %20 : vector<512x128xf32> to vector<512x128xbf16>
      %c0_17 = arith.constant 0 : index
      %c0_18 = arith.constant 0 : index
      %22 = vector.load %arg7[%c0_17, %c0_18] : memref<512x128xbf16, #tpu.memory_space<vmem>>, vector<512x128xbf16>
      tpu.vector_store %arg7[%c0_17, %c0_18], %21 {strides = array<i32>} : memref<512x128xbf16, #tpu.memory_space<vmem>>, vector<512x128xbf16>,
    } else {
    }
    return
  }
  func.func @transform_0(%arg0: i32, %arg1: i32, %arg2: i32) -> (i32, i32) {
    %c0_i32 = arith.constant 0 : i32
    return %arg0, %arg2 : i32, i32
  }
  func.func @transform_1(%arg0: i32, %arg1: i32, %arg2: i32) -> (i32, i32) {
    %c0_i32 = arith.constant 0 : i32
    return %arg2, %arg1 : i32, i32
  }
  func.func @transform_2(%arg0: i32, %arg1: i32, %arg2: i32) -> (i32, i32) {
    %c0_i32 = arith.constant 0 : i32
    %c0_i32_0 = arith.constant 0 : i32
    return %c0_i32, %arg1 : i32, i32
  }
  func.func @transform_3(%arg0: i32, %arg1: i32, %arg2: i32) -> (i32, i32) {
    %c0_i32 = arith.constant 0 : i32
    %c0_i32_0 = arith.constant 0 : i32
    return %c0_i32, %arg1 : i32, i32
  }
  func.func @transform_4(%arg0: i32, %arg1: i32, %arg2: i32) -> (i32, i32) {
    %c0_i32 = arith.constant 0 : i32
    return %arg0, %arg1 : i32, i32
  }
}

</mosaic_0001>

<llo_original>
// kernel: tpu_custom_call.1
$region0: #{tpu_custom_call.1}
  #allocation0 [shape = 'u32[]', space=smem, size = 0x4, offset = 0x4, fixed_abs, tag = 'smem constant byte address 0x4 - core index']
  #allocation1 [shape = 'u32[144,128]{1,0:T(1,128)}', space=vmem, size = 0x12000, scoped, tag = 'internal scratch']
  #allocation2 [shape = 'f32[512,128]{1,0:T(8,128)}', space=vmem, size = 0x40000, scoped, tag = 'scratch operand']
  %s0 = inlined_call_operand.hbm [shape: bf16[1024,384], index: 0, kind: input, shape index: {}]
  %s1 = inlined_call_operand.hbm [shape: bf16[384,128], index: 1, kind: input, shape index: {}]
  %s2 = inlined_call_operand.vmem [shape: f32[1,128], index: 2, kind: input, shape index: {}]
  %s3 = inlined_call_operand.vmem [shape: f32[1,128], index: 3, kind: input, shape index: {}]
  %s4 = inlined_call_operand.hbm [shape: bf16[1024,128], index: 4, kind: output, shape index: {}]
  %s5 = sld [smem:[#allocation0]]
  $region65: #{tpu_custom_call.1} parent=0
    _
  %s7 = ssub.s32 1, %s5
  %s8 = scalar_select 0, %s7, %s5
  $region1: #{tpu_custom_call.1} parent=0
    #allocation3 [shape = 'u8[786432]{0}', space=vmem, size = 0xc0000, scoped, tag = 'input window, operand 0']
    #allocation4 [shape = 's32[2]{0}', space=sflag, size = 0x8, scoped, tag = 'scoped memory for tpu_custom_call.1']
    #allocation5 [shape = 's32[2]{0}', space=sflag, size = 0x8, scoped, tag = 'scoped memory for tpu_custom_call.1']
    #allocation6 [shape = 'u8[98304]{0}', space=vmem, size = 0x18000, scoped, tag = 'input window, operand 1, single buffered']
    #allocation7 [shape = 's32[1]{0}', space=sflag, size = 0x4, scoped, tag = 'scoped memory for tpu_custom_call.1']
    #allocation8 [shape = 'u8[262144]{0}', space=vmem, size = 0x40000, scoped, tag = 'output window, operand 0']
    %9 = vsyncpa [#allocation4], 0
    %s10 = scalar_lea.sflag [#allocation4], 1
    %11 = vsyncpa %s10, 0
    %12 = vsyncpa [#allocation7], 0
    %13 = vsyncpa [#allocation5], 0
    %s14 = scalar_lea.sflag [#allocation5], 1
    %15 = vsyncpa %s14, 0
    loop: start=0, step=1, limit=4
    $region2: #{tpu_custom_call.1} parent=1 // loop_pre_header
      _
    $region3: #{tpu_custom_call.1} parent=1 // loop_header
      %s17 = sphi 0, %s21
      %p18 = scmp.ge.s32.totalorder %s17, 4
      %s24 = sphi 0, %s43
      %s25 = sphi 0, %s39
      %s26 = sphi 0, %s35
      %s27 = sphi 0, %s24
      %s28 = sphi 0, %s25
      %s29 = sphi 0, %s26
      %s30 = sphi 0, %s27
      %s31 = sphi 0, %s28
      %s32 = sphi 0, %s29
      %s48 = sphi 0, %s50
      %s51 = sphi 0, %s48
      %s52 = sphi 0, %s51
      %s68 = sphi 0, %s52
      %s76 = sphi 0, %s78
      %s79 = sphi 0, %s76
      %s80 = sphi 0, %s79
      %s96 = sphi 0, %s80
      %s102 = sphi 0, %s104
      %s105 = sphi 0, %s102
      %s106 = sphi 0, %s105
      %s122 = sphi 0, %s106
      %s128 = sphi 0, %s130
      %s131 = sphi 0, %s128
      %s132 = sphi 0, %s131
      %s148 = sphi 0, %s132
      %s156 = sphi 0, %s158
      %s159 = sphi 0, %s156
      %s160 = sphi 0, %s159
      %s176 = sphi 0, %s160
    $region4: #{tpu_custom_call.1} parent=1 // loop_header_branch
      %20 = sbr.rel (%p18) target = $region8
    $region5: #{tpu_custom_call.1} parent=1 // loop_body
      %s22 = ssub.s32 %s17, 1
      %s23 = ssub.s32 %s17, 2
      %s33 = sadd.s32 1, %s26
      %p34 = scmp.ge.s32.totalorder %s33, 1
      %s35 = scalar_select %p34, 0, %s33
      %s36 = sadd.s32 1, %s25
      %s37 = scalar_select %p34, %s36, %s25
      %p38 = scmp.ge.s32.totalorder %s37, 1
      %s39 = scalar_select %p38, 0, %s37
      %s40 = sadd.s32 1, %s24
      %s41 = scalar_select %p38, %s40, %s24
      %p42 = scmp.ge.s32.totalorder %s41, 2
      %s43 = scalar_select %p42, 0, %s41
      %s44 = ssub.s32 %s24, %s43
      %s45 = ssub.s32 %s26, %s35
      %s46 = sor.u32 %s44, %s45
      %p47 = scmp.eq.s32.totalorder %s46, 0
      %s49 = sadd.s32 %s48, 1
      %s50 = scalar_select %p47, %s48, %s49
      %p53 = pneg %p47
      %p54 = scmp.eq.s32.totalorder %s17, 1
      %p55 = por %p53, %p54
      %p56 = scmp.ne.s32.totalorder %s48, %s51
      %p57 = scmp.eq.s32.totalorder %s17, 0
      %p58 = por %p56, %p57
      %p59 = scmp.ne.s32.totalorder %s48, %s51
      %p60 = scmp.eq.s32.totalorder %s22, 1
      %p61 = por %p59, %p60
      %p62 = scmp.ne.s32.totalorder %s51, %s52
      %p63 = scmp.eq.s32.totalorder %s22, 0
      %p64 = por %p62, %p63
      %p65 = scmp.ne.s32.totalorder %s51, %s52
      %p66 = scmp.eq.s32.totalorder %s23, 1
      %p67 = por %p65, %p66
      %p69 = scmp.ne.s32.totalorder %s52, %s68
      %p70 = scmp.eq.s32.totalorder %s23, 0
      %p71 = por %p69, %p70
      %s72 = ssub.s32 %s26, %s35
      %s73 = ssub.s32 %s25, %s39
      %s74 = sor.u32 %s72, %s73
      %p75 = scmp.eq.s32.totalorder %s74, 0
      %s77 = sadd.s32 %s76, 1
      %s78 = scalar_select %p75, %s76, %s77
      %p81 = pneg %p75
      %p82 = scmp.eq.s32.totalorder %s17, 1
      %p83 = por %p81, %p82
      %p84 = scmp.ne.s32.totalorder %s76, %s79
      %p85 = scmp.eq.s32.totalorder %s17, 0
      %p86 = por %p84, %p85
      %p87 = scmp.ne.s32.totalorder %s76, %s79
      %p88 = scmp.eq.s32.totalorder %s22, 1
      %p89 = por %p87, %p88
      %p90 = scmp.ne.s32.totalorder %s79, %s80
      %p91 = scmp.eq.s32.totalorder %s22, 0
      %p92 = por %p90, %p91
      %p93 = scmp.ne.s32.totalorder %s79, %s80
      %p94 = scmp.eq.s32.totalorder %s23, 1
      %p95 = por %p93, %p94
      %p97 = scmp.ne.s32.totalorder %s80, %s96
      %p98 = scmp.eq.s32.totalorder %s23, 0
      %p99 = por %p97, %p98
      %s100 = ssub.s32 %s25, %s39
      %p101 = scmp.eq.s32.totalorder %s100, 0
      %s103 = sadd.s32 %s102, 1
      %s104 = scalar_select %p101, %s102, %s103
      %p107 = pneg %p101
      %p108 = scmp.eq.s32.totalorder %s17, 1
      %p109 = por %p107, %p108
      %p110 = scmp.ne.s32.totalorder %s102, %s105
      %p111 = scmp.eq.s32.totalorder %s17, 0
      %p112 = por %p110, %p111
      %p113 = scmp.ne.s32.totalorder %s102, %s105
      %p114 = scmp.eq.s32.totalorder %s22, 1
      %p115 = por %p113, %p114
      %p116 = scmp.ne.s32.totalorder %s105, %s106
      %p117 = scmp.eq.s32.totalorder %s22, 0
      %p118 = por %p116, %p117
      %p119 = scmp.ne.s32.totalorder %s105, %s106
      %p120 = scmp.eq.s32.totalorder %s23, 1
      %p121 = por %p119, %p120
      %p123 = scmp.ne.s32.totalorder %s106, %s122
      %p124 = scmp.eq.s32.totalorder %s23, 0
      %p125 = por %p123, %p124
      %s126 = ssub.s32 %s25, %s39
      %p127 = scmp.eq.s32.totalorder %s126, 0
      %s129 = sadd.s32 %s128, 1
      %s130 = scalar_select %p127, %s128, %s129
      %p133 = pneg %p127
      %p134 = scmp.eq.s32.totalorder %s17, 1
      %p135 = por %p133, %p134
      %p136 = scmp.ne.s32.totalorder %s128, %s131
      %p137 = scmp.eq.s32.totalorder %s17, 0
      %p138 = por %p136, %p137
      %p139 = scmp.ne.s32.totalorder %s128, %s131
      %p140 = scmp.eq.s32.totalorder %s22, 1
      %p141 = por %p139, %p140
      %p142 = scmp.ne.s32.totalorder %s131, %s132
      %p143 = scmp.eq.s32.totalorder %s22, 0
      %p144 = por %p142, %p143
      %p145 = scmp.ne.s32.totalorder %s131, %s132
      %p146 = scmp.eq.s32.totalorder %s23, 1
      %p147 = por %p145, %p146
      %p149 = scmp.ne.s32.totalorder %s132, %s148
      %p150 = scmp.eq.s32.totalorder %s23, 0
      %p151 = por %p149, %p150
      %s152 = ssub.s32 %s24, %s43
      %s153 = ssub.s32 %s25, %s39
      %s154 = sor.u32 %s152, %s153
      %p155 = scmp.eq.s32.totalorder %s154, 0
      %s157 = sadd.s32 %s156, 1
      %s158 = scalar_select %p155, %s156, %s157
      %p161 = pneg %p155
      %p162 = scmp.eq.s32.totalorder %s17, 1
      %p163 = por %p161, %p162
      %p164 = scmp.ne.s32.totalorder %s156, %s159
      %p165 = scmp.eq.s32.totalorder %s17, 0
      %p166 = por %p164, %p165
      %p167 = scmp.ne.s32.totalorder %s156, %s159
      %p168 = scmp.eq.s32.totalorder %s22, 1
      %p169 = por %p167, %p168
      %p170 = scmp.ne.s32.totalorder %s159, %s160
      %p171 = scmp.eq.s32.totalorder %s22, 0
      %p172 = por %p170, %p171
      %p173 = scmp.ne.s32.totalorder %s159, %s160
      %p174 = scmp.eq.s32.totalorder %s23, 1
      %p175 = por %p173, %p174
      %p177 = scmp.ne.s32.totalorder %s160, %s176
      %p178 = scmp.eq.s32.totalorder %s23, 0
      %p179 = por %p177, %p178
      %p180 = scmp.le.s32.totalorder 1, %s17
      %p181 = scmp.lt.s32.totalorder %s17, 3
      %p182 = pnand %p180, %p181
      %p183 = pneg %p182
      // Predicated region
      $region9: #{tpu_custom_call.1} parent=5 // pred_check
        _
      $region10: #{tpu_custom_call.1} parent=5 // pred_check_branch
        %185 = sbr.rel (%p182) target = $region12
      $region11: #{tpu_custom_call.1} parent=5 // pred_region
        %s186 = ssub.s32 %s17, 1
        // Predicated region
        $region13: #{tpu_custom_call.1} parent=11 // pred_check
          %p187 = pneg %p92
        $region14: #{tpu_custom_call.1} parent=11 // pred_check_branch
          %189 = sbr.rel (%p187) target = $region16
        $region15: #{tpu_custom_call.1} parent=11 // pred_region
          %s190 = smul.u32 48, %s29
          %s192 = ssub.s32 3072, 3072
          %193 = vsyncadd [#allocation7], %s192
          %s194 = sadd.s32 %s28, %s190
          %s195 = smul.addr %s194, 64
          %s196 = scalar_lea.hbm %s1, %s195
          %s197 = sshll.u32 [#allocation6], 4
          %s198 = int_to_ptr.vmem [resolvable:$true] %s197
          %203 = dma.hbm_to_vmem [thread:$0]  %s196, 3072, %s198, [#allocation7], 64, 64, 4
        $region16: #{tpu_custom_call.1} parent=11 // pred_fallthru
          _
        // Predicated region
        $region17: #{tpu_custom_call.1} parent=11 // pred_check
          %p204 = pneg %p118
        $region18: #{tpu_custom_call.1} parent=11 // pred_check_branch
          %206 = sbr.rel (%p204) target = $region20
        $region19: #{tpu_custom_call.1} parent=11 // pred_region
          %p207 = scmp.lt.s32.totalorder %s28, 0
          %s208 = scalar_select %p207, %s28, 0
          %s209 = scalar_lea.vmem %s2, %s208
        $region20: #{tpu_custom_call.1} parent=11 // pred_fallthru
          _
        // Predicated region
        $region21: #{tpu_custom_call.1} parent=11 // pred_check
          %p210 = pneg %p144
        $region22: #{tpu_custom_call.1} parent=11 // pred_check_branch
          %212 = sbr.rel (%p210) target = $region24
        $region23: #{tpu_custom_call.1} parent=11 // pred_region
          %p213 = scmp.lt.s32.totalorder %s28, 0
          %s214 = scalar_select %p213, %s28, 0
          %s215 = scalar_lea.vmem %s3, %s214
        $region24: #{tpu_custom_call.1} parent=11 // pred_fallthru
          _
      $region12: #{tpu_custom_call.1} parent=5 // pred_fallthru
        _
      %p216 = scmp.lt.s32.totalorder %s17, 2
      // Predicated region
      $region25: #{tpu_custom_call.1} parent=5 // pred_check
        %p217 = pneg %p216
      $region26: #{tpu_custom_call.1} parent=5 // pred_check_branch
        %219 = sbr.rel (%p217) target = $region28
      $region27: #{tpu_custom_call.1} parent=5 // pred_region
        // Predicated region
        $region29: #{tpu_custom_call.1} parent=27 // pred_check
          %p220 = pneg %p58
        $region30: #{tpu_custom_call.1} parent=27 // pred_check_branch
          %222 = sbr.rel (%p220) target = $region32
        $region31: #{tpu_custom_call.1} parent=27 // pred_region
          %s223 = sand.u32 %s48, 1
          %s224 = scalar_lea.sflag [#allocation4], %s223
          %s225 = sand.u32 %s48, 1
          %s226 = smul.addr %s225, 768
          %s227 = scalar_lea.vmem [#allocation3], %s226
          %s228 = smul.u32 64, %s24
          %s229 = smul.u32 3, %s26
          %s231 = ssub.s32 12288, 12288
          %232 = vsyncadd %s224, %s231
          %s233 = smul.addr %s228, 3
          %s234 = sadd.s32 %s229, %s233
          %s235 = smul.addr %s234, 64
          %s236 = scalar_lea.hbm %s0, %s235
          %s237 = sshll.u32 %s227, 4
          %s238 = int_to_ptr.vmem [resolvable:$true] %s237
          %243 = dma.hbm_to_vmem [thread:$0]  %s236, 12288, %s238, %s224, 192, 192, 12
        $region32: #{tpu_custom_call.1} parent=27 // pred_fallthru
          _
      $region28: #{tpu_custom_call.1} parent=5 // pred_fallthru
        _
      %p244 = scmp.le.s32.totalorder 1, %s17
      %p245 = scmp.lt.s32.totalorder %s17, 3
      %p246 = pnand %p244, %p245
      %p247 = pneg %p246
      // Predicated region
      $region33: #{tpu_custom_call.1} parent=5 // pred_check
        _
      $region34: #{tpu_custom_call.1} parent=5 // pred_check_branch
        %249 = sbr.rel (%p246) target = $region36
      $region35: #{tpu_custom_call.1} parent=5 // pred_region
        %s250 = ssub.s32 %s17, 1
        %s251 = sand.u32 %s51, 1
        %s252 = scalar_lea.sflag [#allocation4], %s251
        %s253 = sand.u32 %s51, 1
        %s254 = smul.addr %s253, 768
        %s255 = scalar_lea.vmem [#allocation3], %s254
        // Predicated region
        $region37: #{tpu_custom_call.1} parent=35 // pred_check
          %p256 = pneg %p64
        $region38: #{tpu_custom_call.1} parent=35 // pred_check_branch
          %258 = sbr.rel (%p256) target = $region40
        $region39: #{tpu_custom_call.1} parent=35 // pred_region
          %259 = dma.done %s252, 12288
        $region40: #{tpu_custom_call.1} parent=35 // pred_fallthru
          _
        // Predicated region
        $region41: #{tpu_custom_call.1} parent=35 // pred_check
          %p260 = pneg %p92
        $region42: #{tpu_custom_call.1} parent=35 // pred_check_branch
          %262 = sbr.rel (%p260) target = $region44
        $region43: #{tpu_custom_call.1} parent=35 // pred_region
          %263 = dma.done [#allocation7], 3072
        $region44: #{tpu_custom_call.1} parent=35 // pred_fallthru
          _
        %s264 = sand.u32 %s51, 1
        %s265 = scalar_lea.sflag [#allocation4], %s264
        %s266 = sand.u32 %s51, 1
        %s267 = smul.addr %s266, 768
        %s268 = scalar_lea.vmem [#allocation3], %s267
        %p269 = pneg %p64
        %p270 = pneg %p61
        %p271 = pneg %p92
        %p272 = pneg %p89
        %p273 = scmp.lt.s32.totalorder %s28, 0
        %s274 = scalar_select %p273, %s28, 0
        %s275 = scalar_lea.vmem %s2, %s274
        %p276 = pneg %p118
        %p277 = pneg %p115
        %p278 = scmp.lt.s32.totalorder %s28, 0
        %s279 = scalar_select %p278, %s28, 0
        %s280 = scalar_lea.vmem %s3, %s279
        %p281 = pneg %p144
        %p282 = pneg %p141
        %p283 = pneg %p172
        %p284 = pneg %p169
        %s285 = sand.u32 %s159, 1
        %s286 = scalar_lea.sflag [#allocation5], %s285
        %s287 = sand.u32 %s159, 1
        %s288 = smul.addr %s287, 256
        %s289 = scalar_lea.vmem [#allocation8], %s288
        %s290 = smul.u32 64, %s27
        %s291 = smul.u32 3, %s29
        %s292 = smul.u32 48, %s29
        %p293 = scmp.lt.s32.totalorder %s28, 0
        %s294 = scalar_select %p293, %s28, 0
        %s295 = scalar_lea.vmem %s2, %s294
        %p296 = scmp.lt.s32.totalorder %s28, 0
        %s297 = scalar_select %p296, %s28, 0
        %s298 = scalar_lea.vmem %s3, %s297
        %s299 = smul.u32 64, %s27
        %p301 = scmp.eq.s32.totalorder %s29, 0
        // Predicated region
        $region45: #{tpu_custom_call.1} parent=35 // pred_check
          %p302 = pneg %p301
        $region46: #{tpu_custom_call.1} parent=35 // pred_check_branch
          %304 = sbr.rel (%p302) target = $region48
        $region47: #{tpu_custom_call.1} parent=35 // pred_region
          %305 = vst [vmem:[#allocation2] sm:$0xff] 0.0
          %306 = vst [vmem:[#allocation2 + $0x8] sm:$0xff] 0.0
          %307 = vst [vmem:[#allocation2 + $0x10] sm:$0xff] 0.0
          %308 = vst [vmem:[#allocation2 + $0x18] sm:$0xff] 0.0
          %309 = vst [vmem:[#allocation2 + $0x20] sm:$0xff] 0.0
          %310 = vst [vmem:[#allocation2 + $0x28] sm:$0xff] 0.0
          %311 = vst [vmem:[#allocation2 + $0x30] sm:$0xff] 0.0
          %312 = vst [vmem:[#allocation2 + $0x38] sm:$0xff] 0.0
          %313 = vst [vmem:[#allocation2 + $0x40] sm:$0xff] 0.0
          %314 = vst [vmem:[#allocation2 + $0x48] sm:$0xff] 0.0
          %315 = vst [vmem:[#allocation2 + $0x50] sm:$0xff] 0.0
          %316 = vst [vmem:[#allocation2 + $0x58] sm:$0xff] 0.0
          %317 = vst [vmem:[#allocation2 + $0x60] sm:$0xff] 0.0
          %318 = vst [vmem:[#allocation2 + $0x68] sm:$0xff] 0.0
          %319 = vst [vmem:[#allocation2 + $0x70] sm:$0xff] 0.0
          %320 = vst [vmem:[#allocation2 + $0x78] sm:$0xff] 0.0
          %321 = vst [vmem:[#allocation2 + $0x80] sm:$0xff] 0.0
          %322 = vst [vmem:[#allocation2 + $0x88] sm:$0xff] 0.0
          %323 = vst [vmem:[#allocation2 + $0x90] sm:$0xff] 0.0
          %324 = vst [vmem:[#allocation2 + $0x98] sm:$0xff] 0.0
          %325 = vst [vmem:[#allocation2 + $0xa0] sm:$0xff] 0.0
          %326 = vst [vmem:[#allocation2 + $0xa8] sm:$0xff] 0.0
          %327 = vst [vmem:[#allocation2 + $0xb0] sm:$0xff] 0.0
          %328 = vst [vmem:[#allocation2 + $0xb8] sm:$0xff] 0.0
          %329 = vst [vmem:[#allocation2 + $0xc0] sm:$0xff] 0.0
          %330 = vst [vmem:[#allocation2 + $0xc8] sm:$0xff] 0.0
          %331 = vst [vmem:[#allocation2 + $0xd0] sm:$0xff] 0.0
          %332 = vst [vmem:[#allocation2 + $0xd8] sm:$0xff] 0.0
          %333 = vst [vmem:[#allocation2 + $0xe0] sm:$0xff] 0.0
          %334 = vst [vmem:[#allocation2 + $0xe8] sm:$0xff] 0.0
          %335 = vst [vmem:[#allocation2 + $0xf0] sm:$0xff] 0.0
          %336 = vst [vmem:[#allocation2 + $0xf8] sm:$0xff] 0.0
          %337 = vst [vmem:[#allocation2 + $0x100] sm:$0xff] 0.0
          %338 = vst [vmem:[#allocation2 + $0x108] sm:$0xff] 0.0
          %339 = vst [vmem:[#allocation2 + $0x110] sm:$0xff] 0.0
          %340 = vst [vmem:[#allocation2 + $0x118] sm:$0xff] 0.0
          %341 = vst [vmem:[#allocation2 + $0x120] sm:$0xff] 0.0
          %342 = vst [vmem:[#allocation2 + $0x128] sm:$0xff] 0.0
          %343 = vst [vmem:[#allocation2 + $0x130] sm:$0xff] 0.0
          %344 = vst [vmem:[#allocation2 + $0x138] sm:$0xff] 0.0
          %345 = vst [vmem:[#allocation2 + $0x140] sm:$0xff] 0.0
          %346 = vst [vmem:[#allocation2 + $0x148] sm:$0xff] 0.0
          %347 = vst [vmem:[#allocation2 + $0x150] sm:$0xff] 0.0
          %348 = vst [vmem:[#allocation2 + $0x158] sm:$0xff] 0.0
          %349 = vst [vmem:[#allocation2 + $0x160] sm:$0xff] 0.0
          %350 = vst [vmem:[#allocation2 + $0x168] sm:$0xff] 0.0
          %351 = vst [vmem:[#allocation2 + $0x170] sm:$0xff] 0.0
          %352 = vst [vmem:[#allocation2 + $0x178] sm:$0xff] 0.0
          %353 = vst [vmem:[#allocation2 + $0x180] sm:$0xff] 0.0
          %354 = vst [vmem:[#allocation2 + $0x188] sm:$0xff] 0.0
          %355 = vst [vmem:[#allocation2 + $0x190] sm:$0xff] 0.0
          %356 = vst [vmem:[#allocation2 + $0x198] sm:$0xff] 0.0
          %357 = vst [vmem:[#allocation2 + $0x1a0] sm:$0xff] 0.0
          %358 = vst [vmem:[#allocation2 + $0x1a8] sm:$0xff] 0.0
          %359 = vst [vmem:[#allocation2 + $0x1b0] sm:$0xff] 0.0
          %360 = vst [vmem:[#allocation2 + $0x1b8] sm:$0xff] 0.0
          %361 = vst [vmem:[#allocation2 + $0x1c0] sm:$0xff] 0.0
          %362 = vst [vmem:[#allocation2 + $0x1c8] sm:$0xff] 0.0
          %363 = vst [vmem:[#allocation2 + $0x1d0] sm:$0xff] 0.0
          %364 = vst [vmem:[#allocation2 + $0x1d8] sm:$0xff] 0.0
          %365 = vst [vmem:[#allocation2 + $0x1e0] sm:$0xff] 0.0
          %366 = vst [vmem:[#allocation2 + $0x1e8] sm:$0xff] 0.0
          %367 = vst [vmem:[#allocation2 + $0x1f0] sm:$0xff] 0.0
          %368 = vst [vmem:[#allocation2 + $0x1f8] sm:$0xff] 0.0
        $region48: #{tpu_custom_call.1} parent=35 // pred_fallthru
          _
        %v369 = vld [vmem:[#allocation2] sm:$0xff]
        %v370 = vld [vmem:[#allocation2 + $0x8] sm:$0xff]
        %v371 = vld [vmem:[#allocation2 + $0x10] sm:$0xff]
        %v372 = vld [vmem:[#allocation2 + $0x18] sm:$0xff]
        %v373 = vld [vmem:[#allocation2 + $0x20] sm:$0xff]
        %v374 = vld [vmem:[#allocation2 + $0x28] sm:$0xff]
        %v375 = vld [vmem:[#allocation2 + $0x30] sm:$0xff]
        %v376 = vld [vmem:[#allocation2 + $0x38] sm:$0xff]
        %v377 = vld [vmem:[#allocation2 + $0x40] sm:$0xff]
        %v378 = vld [vmem:[#allocation2 + $0x48] sm:$0xff]
        %v379 = vld [vmem:[#allocation2 + $0x50] sm:$0xff]
        %v380 = vld [vmem:[#allocation2 + $0x58] sm:$0xff]
        %v381 = vld [vmem:[#allocation2 + $0x60] sm:$0xff]
        %v382 = vld [vmem:[#allocation2 + $0x68] sm:$0xff]
        %v383 = vld [vmem:[#allocation2 + $0x70] sm:$0xff]
        %v384 = vld [vmem:[#allocation2 + $0x78] sm:$0xff]
        %v385 = vld [vmem:[#allocation2 + $0x80] sm:$0xff]
        %v386 = vld [vmem:[#allocation2 + $0x88] sm:$0xff]
        %v387 = vld [vmem:[#allocation2 + $0x90] sm:$0xff]
        %v388 = vld [vmem:[#allocation2 + $0x98] sm:$0xff]
        %v389 = vld [vmem:[#allocation2 + $0xa0] sm:$0xff]
        %v390 = vld [vmem:[#allocation2 + $0xa8] sm:$0xff]
        %v391 = vld [vmem:[#allocation2 + $0xb0] sm:$0xff]
        %v392 = vld [vmem:[#allocation2 + $0xb8] sm:$0xff]
        %v393 = vld [vmem:[#allocation2 + $0xc0] sm:$0xff]
        %v394 = vld [vmem:[#allocation2 + $0xc8] sm:$0xff]
        %v395 = vld [vmem:[#allocation2 + $0xd0] sm:$0xff]
        %v396 = vld [vmem:[#allocation2 + $0xd8] sm:$0xff]
        %v397 = vld [vmem:[#allocation2 + $0xe0] sm:$0xff]
        %v398 = vld [vmem:[#allocation2 + $0xe8] sm:$0xff]
        %v399 = vld [vmem:[#allocation2 + $0xf0] sm:$0xff]
        %v400 = vld [vmem:[#allocation2 + $0xf8] sm:$0xff]
        %v401 = vld [vmem:[#allocation2 + $0x100] sm:$0xff]
        %v402 = vld [vmem:[#allocation2 + $0x108] sm:$0xff]
        %v403 = vld [vmem:[#allocation2 + $0x110] sm:$0xff]
        %v404 = vld [vmem:[#allocation2 + $0x118] sm:$0xff]
        %v405 = vld [vmem:[#allocation2 + $0x120] sm:$0xff]
        %v406 = vld [vmem:[#allocation2 + $0x128] sm:$0xff]
        %v407 = vld [vmem:[#allocation2 + $0x130] sm:$0xff]
        %v408 = vld [vmem:[#allocation2 + $0x138] sm:$0xff]
        %v409 = vld [vmem:[#allocation2 + $0x140] sm:$0xff]
        %v410 = vld [vmem:[#allocation2 + $0x148] sm:$0xff]
        %v411 = vld [vmem:[#allocation2 + $0x150] sm:$0xff]
        %v412 = vld [vmem:[#allocation2 + $0x158] sm:$0xff]
        %v413 = vld [vmem:[#allocation2 + $0x160] sm:$0xff]
        %v414 = vld [vmem:[#allocation2 + $0x168] sm:$0xff]
        %v415 = vld [vmem:[#allocation2 + $0x170] sm:$0xff]
        %v416 = vld [vmem:[#allocation2 + $0x178] sm:$0xff]
        %v417 = vld [vmem:[#allocation2 + $0x180] sm:$0xff]
        %v418 = vld [vmem:[#allocation2 + $0x188] sm:$0xff]
        %v419 = vld [vmem:[#allocation2 + $0x190] sm:$0xff]
        %v420 = vld [vmem:[#allocation2 + $0x198] sm:$0xff]
        %v421 = vld [vmem:[#allocation2 + $0x1a0] sm:$0xff]
        %v422 = vld [vmem:[#allocation2 + $0x1a8] sm:$0xff]
        %v423 = vld [vmem:[#allocation2 + $0x1b0] sm:$0xff]
        %v424 = vld [vmem:[#allocation2 + $0x1b8] sm:$0xff]
        %v425 = vld [vmem:[#allocation2 + $0x1c0] sm:$0xff]
        %v426 = vld [vmem:[#allocation2 + $0x1c8] sm:$0xff]
        %v427 = vld [vmem:[#allocation2 + $0x1d0] sm:$0xff]
        %v428 = vld [vmem:[#allocation2 + $0x1d8] sm:$0xff]
        %v429 = vld [vmem:[#allocation2 + $0x1e0] sm:$0xff]
        %v430 = vld [vmem:[#allocation2 + $0x1e8] sm:$0xff]
        %v431 = vld [vmem:[#allocation2 + $0x1f0] sm:$0xff]
        %v432 = vld [vmem:[#allocation2 + $0x1f8] sm:$0xff]
        %v433 = vld [vmem:[%s255] sm:$0xff]
        %v434 = vld [vmem:[%s255 + $0x8] sm:$0xf]
        %v435 = vld [vmem:[%s255 + $0xc] sm:$0xff]
        %v436 = vld [vmem:[%s255 + $0x14] sm:$0xf]
        %v437 = vld [vmem:[%s255 + $0x18] sm:$0xff]
        %v438 = vld [vmem:[%s255 + $0x20] sm:$0xf]
        %v439 = vld [vmem:[%s255 + $0x24] sm:$0xff]
        %v440 = vld [vmem:[%s255 + $0x2c] sm:$0xf]
        %v441 = vld [vmem:[%s255 + $0x30] sm:$0xff]
        %v442 = vld [vmem:[%s255 + $0x38] sm:$0xf]
        %v443 = vld [vmem:[%s255 + $0x3c] sm:$0xff]
        %v444 = vld [vmem:[%s255 + $0x44] sm:$0xf]
        %v445 = vld [vmem:[%s255 + $0x48] sm:$0xff]
        %v446 = vld [vmem:[%s255 + $0x50] sm:$0xf]
        %v447 = vld [vmem:[%s255 + $0x54] sm:$0xff]
        %v448 = vld [vmem:[%s255 + $0x5c] sm:$0xf]
        %v449 = vld [vmem:[%s255 + $0x60] sm:$0xff]
        %v450 = vld [vmem:[%s255 + $0x68] sm:$0xf]
        %v451 = vld [vmem:[%s255 + $0x6c] sm:$0xff]
        %v452 = vld [vmem:[%s255 + $0x74] sm:$0xf]
        %v453 = vld [vmem:[%s255 + $0x78] sm:$0xff]
        %v454 = vld [vmem:[%s255 + $0x80] sm:$0xf]
        %v455 = vld [vmem:[%s255 + $0x84] sm:$0xff]
        %v456 = vld [vmem:[%s255 + $0x8c] sm:$0xf]
        %v457 = vld [vmem:[%s255 + $0x90] sm:$0xff]
        %v458 = vld [vmem:[%s255 + $0x98] sm:$0xf]
        %v459 = vld [vmem:[%s255 + $0x9c] sm:$0xff]
        %v460 = vld [vmem:[%s255 + $0xa4] sm:$0xf]
        %v461 = vld [vmem:[%s255 + $0xa8] sm:$0xff]
        %v462 = vld [vmem:[%s255 + $0xb0] sm:$0xf]
        %v463 = vld [vmem:[%s255 + $0xb4] sm:$0xff]
        %v464 = vld [vmem:[%s255 + $0xbc] sm:$0xf]
        %v465 = vld [vmem:[%s255 + $0xc0] sm:$0xff]
        %v466 = vld [vmem:[%s255 + $0xc8] sm:$0xf]
        %v467 = vld [vmem:[%s255 + $0xcc] sm:$0xff]
        %v468 = vld [vmem:[%s255 + $0xd4] sm:$0xf]
        %v469 = vld [vmem:[%s255 + $0xd8] sm:$0xff]
        %v470 = vld [vmem:[%s255 + $0xe0] sm:$0xf]
        %v471 = vld [vmem:[%s255 + $0xe4] sm:$0xff]
        %v472 = vld [vmem:[%s255 + $0xec] sm:$0xf]
        %v473 = vld [vmem:[%s255 + $0xf0] sm:$0xff]
        %v474 = vld [vmem:[%s255 + $0xf8] sm:$0xf]
        %v475 = vld [vmem:[%s255 + $0xfc] sm:$0xff]
        %v476 = vld [vmem:[%s255 + $0x104] sm:$0xf]
        %v477 = vld [vmem:[%s255 + $0x108] sm:$0xff]
        %v478 = vld [vmem:[%s255 + $0x110] sm:$0xf]
        %v479 = vld [vmem:[%s255 + $0x114] sm:$0xff]
        %v480 = vld [vmem:[%s255 + $0x11c] sm:$0xf]
        %v481 = vld [vmem:[%s255 + $0x120] sm:$0xff]
        %v482 = vld [vmem:[%s255 + $0x128] sm:$0xf]
        %v483 = vld [vmem:[%s255 + $0x12c] sm:$0xff]
        %v484 = vld [vmem:[%s255 + $0x134] sm:$0xf]
        %v485 = vld [vmem:[%s255 + $0x138] sm:$0xff]
        %v486 = vld [vmem:[%s255 + $0x140] sm:$0xf]
        %v487 = vld [vmem:[%s255 + $0x144] sm:$0xff]
        %v488 = vld [vmem:[%s255 + $0x14c] sm:$0xf]
        %v489 = vld [vmem:[%s255 + $0x150] sm:$0xff]
        %v490 = vld [vmem:[%s255 + $0x158] sm:$0xf]
        %v491 = vld [vmem:[%s255 + $0x15c] sm:$0xff]
        %v492 = vld [vmem:[%s255 + $0x164] sm:$0xf]
        %v493 = vld [vmem:[%s255 + $0x168] sm:$0xff]
        %v494 = vld [vmem:[%s255 + $0x170] sm:$0xf]
        %v495 = vld [vmem:[%s255 + $0x174] sm:$0xff]
        %v496 = vld [vmem:[%s255 + $0x17c] sm:$0xf]
        %v497 = vld [vmem:[%s255 + $0x180] sm:$0xff]
        %v498 = vld [vmem:[%s255 + $0x188] sm:$0xf]
        %v499 = vld [vmem:[%s255 + $0x18c] sm:$0xff]
        %v500 = vld [vmem:[%s255 + $0x194] sm:$0xf]
        %v501 = vld [vmem:[%s255 + $0x198] sm:$0xff]
        %v502 = vld [vmem:[%s255 + $0x1a0] sm:$0xf]
        %v503 = vld [vmem:[%s255 + $0x1a4] sm:$0xff]
        %v504 = vld [vmem:[%s255 + $0x1ac] sm:$0xf]
        %v505 = vld [vmem:[%s255 + $0x1b0] sm:$0xff]
        %v506 = vld [vmem:[%s255 + $0x1b8] sm:$0xf]
        %v507 = vld [vmem:[%s255 + $0x1bc] sm:$0xff]
        %v508 = vld [vmem:[%s255 + $0x1c4] sm:$0xf]
        %v509 = vld [vmem:[%s255 + $0x1c8] sm:$0xff]
        %v510 = vld [vmem:[%s255 + $0x1d0] sm:$0xf]
        %v511 = vld [vmem:[%s255 + $0x1d4] sm:$0xff]
        %v512 = vld [vmem:[%s255 + $0x1dc] sm:$0xf]
        %v513 = vld [vmem:[%s255 + $0x1e0] sm:$0xff]
        %v514 = vld [vmem:[%s255 + $0x1e8] sm:$0xf]
        %v515 = vld [vmem:[%s255 + $0x1ec] sm:$0xff]
        %v516 = vld [vmem:[%s255 + $0x1f4] sm:$0xf]
        %v517 = vld [vmem:[%s255 + $0x1f8] sm:$0xff]
        %v518 = vld [vmem:[%s255 + $0x200] sm:$0xf]
        %v519 = vld [vmem:[%s255 + $0x204] sm:$0xff]
        %v520 = vld [vmem:[%s255 + $0x20c] sm:$0xf]
        %v521 = vld [vmem:[%s255 + $0x210] sm:$0xff]
        %v522 = vld [vmem:[%s255 + $0x218] sm:$0xf]
        %v523 = vld [vmem:[%s255 + $0x21c] sm:$0xff]
        %v524 = vld [vmem:[%s255 + $0x224] sm:$0xf]
        %v525 = vld [vmem:[%s255 + $0x228] sm:$0xff]
        %v526 = vld [vmem:[%s255 + $0x230] sm:$0xf]
        %v527 = vld [vmem:[%s255 + $0x234] sm:$0xff]
        %v528 = vld [vmem:[%s255 + $0x23c] sm:$0xf]
        %v529 = vld [vmem:[%s255 + $0x240] sm:$0xff]
        %v530 = vld [vmem:[%s255 + $0x248] sm:$0xf]
        %v531 = vld [vmem:[%s255 + $0x24c] sm:$0xff]
        %v532 = vld [vmem:[%s255 + $0x254] sm:$0xf]
        %v533 = vld [vmem:[%s255 + $0x258] sm:$0xff]
        %v534 = vld [vmem:[%s255 + $0x260] sm:$0xf]
        %v535 = vld [vmem:[%s255 + $0x264] sm:$0xff]
        %v536 = vld [vmem:[%s255 + $0x26c] sm:$0xf]
        %v537 = vld [vmem:[%s255 + $0x270] sm:$0xff]
        %v538 = vld [vmem:[%s255 + $0x278] sm:$0xf]
        %v539 = vld [vmem:[%s255 + $0x27c] sm:$0xff]
        %v540 = vld [vmem:[%s255 + $0x284] sm:$0xf]
        %v541 = vld [vmem:[%s255 + $0x288] sm:$0xff]
        %v542 = vld [vmem:[%s255 + $0x290] sm:$0xf]
        %v543 = vld [vmem:[%s255 + $0x294] sm:$0xff]
        %v544 = vld [vmem:[%s255 + $0x29c] sm:$0xf]
        %v545 = vld [vmem:[%s255 + $0x2a0] sm:$0xff]
        %v546 = vld [vmem:[%s255 + $0x2a8] sm:$0xf]
        %v547 = vld [vmem:[%s255 + $0x2ac] sm:$0xff]
        %v548 = vld [vmem:[%s255 + $0x2b4] sm:$0xf]
        %v549 = vld [vmem:[%s255 + $0x2b8] sm:$0xff]
        %v550 = vld [vmem:[%s255 + $0x2c0] sm:$0xf]
        %v551 = vld [vmem:[%s255 + $0x2c4] sm:$0xff]
        %v552 = vld [vmem:[%s255 + $0x2cc] sm:$0xf]
        %v553 = vld [vmem:[%s255 + $0x2d0] sm:$0xff]
        %v554 = vld [vmem:[%s255 + $0x2d8] sm:$0xf]
        %v555 = vld [vmem:[%s255 + $0x2dc] sm:$0xff]
        %v556 = vld [vmem:[%s255 + $0x2e4] sm:$0xf]
        %v557 = vld [vmem:[%s255 + $0x2e8] sm:$0xff]
        %v558 = vld [vmem:[%s255 + $0x2f0] sm:$0xf]
        %v559 = vld [vmem:[%s255 + $0x2f4] sm:$0xff]
        %v560 = vld [vmem:[%s255 + $0x2fc] sm:$0xf]
        %v561 = vld [vmem:[#allocation6] sm:$0xf]
        %v562 = vld [vmem:[#allocation6 + $0x4] sm:$0xf]
        %v563 = vld [vmem:[#allocation6 + $0x8] sm:$0xf]
        %v564 = vld [vmem:[#allocation6 + $0xc] sm:$0xf]
        %v565 = vld [vmem:[#allocation6 + $0x10] sm:$0xf]
        %v566 = vld [vmem:[#allocation6 + $0x14] sm:$0xf]
        %v567 = vld [vmem:[#allocation6 + $0x18] sm:$0xf]
        %v568 = vld [vmem:[#allocation6 + $0x1c] sm:$0xf]
        %v569 = vld [vmem:[#allocation6 + $0x20] sm:$0xf]
        %v570 = vld [vmem:[#allocation6 + $0x24] sm:$0xf]
        %v571 = vld [vmem:[#allocation6 + $0x28] sm:$0xf]
        %v572 = vld [vmem:[#allocation6 + $0x2c] sm:$0xf]
        %v573 = vld [vmem:[#allocation6 + $0x30] sm:$0xf]
        %v574 = vld [vmem:[#allocation6 + $0x34] sm:$0xf]
        %v575 = vld [vmem:[#allocation6 + $0x38] sm:$0xf]
        %v576 = vld [vmem:[#allocation6 + $0x3c] sm:$0xf]
        %v577 = vld [vmem:[#allocation6 + $0x40] sm:$0xf]
        %v578 = vld [vmem:[#allocation6 + $0x44] sm:$0xf]
        %v579 = vld [vmem:[#allocation6 + $0x48] sm:$0xf]
        %v580 = vld [vmem:[#allocation6 + $0x4c] sm:$0xf]
        %v581 = vld [vmem:[#allocation6 + $0x50] sm:$0xf]
        %v582 = vld [vmem:[#allocation6 + $0x54] sm:$0xf]
        %v583 = vld [vmem:[#allocation6 + $0x58] sm:$0xf]
        %v584 = vld [vmem:[#allocation6 + $0x5c] sm:$0xf]
        %v585 = vld [vmem:[#allocation6 + $0x60] sm:$0xf]
        %v586 = vld [vmem:[#allocation6 + $0x64] sm:$0xf]
        %v587 = vld [vmem:[#allocation6 + $0x68] sm:$0xf]
        %v588 = vld [vmem:[#allocation6 + $0x6c] sm:$0xf]
        %v589 = vld [vmem:[#allocation6 + $0x70] sm:$0xf]
        %v590 = vld [vmem:[#allocation6 + $0x74] sm:$0xf]
        %v591 = vld [vmem:[#allocation6 + $0x78] sm:$0xf]
        %v592 = vld [vmem:[#allocation6 + $0x7c] sm:$0xf]
        %v593 = vld [vmem:[#allocation6 + $0x80] sm:$0xf]
        %v594 = vld [vmem:[#allocation6 + $0x84] sm:$0xf]
        %v595 = vld [vmem:[#allocation6 + $0x88] sm:$0xf]
        %v596 = vld [vmem:[#allocation6 + $0x8c] sm:$0xf]
        %v597 = vld [vmem:[#allocation6 + $0x90] sm:$0xf]
        %v598 = vld [vmem:[#allocation6 + $0x94] sm:$0xf]
        %v599 = vld [vmem:[#allocation6 + $0x98] sm:$0xf]
        %v600 = vld [vmem:[#allocation6 + $0x9c] sm:$0xf]
        %v601 = vld [vmem:[#allocation6 + $0xa0] sm:$0xf]
        %v602 = vld [vmem:[#allocation6 + $0xa4] sm:$0xf]
        %v603 = vld [vmem:[#allocation6 + $0xa8] sm:$0xf]
        %v604 = vld [vmem:[#allocation6 + $0xac] sm:$0xf]
        %v605 = vld [vmem:[#allocation6 + $0xb0] sm:$0xf]
        %v606 = vld [vmem:[#allocation6 + $0xb4] sm:$0xf]
        %v607 = vld [vmem:[#allocation6 + $0xb8] sm:$0xf]
        %v608 = vld [vmem:[#allocation6 + $0xbc] sm:$0xf]
        %v737 = vunpack.c.l.b16 %v433
        %v738 = vunpack.c.h.b16 %v433
        %v739 = vunpack.c.l.b16 %v434
        %v740 = vunpack.c.l.b16 %v435
        %v741 = vunpack.c.h.b16 %v435
        %v742 = vunpack.c.l.b16 %v436
        %v743 = vunpack.c.l.b16 %v437
        %v744 = vunpack.c.h.b16 %v437
        %v745 = vunpack.c.l.b16 %v438
        %v746 = vunpack.c.l.b16 %v439
        %v747 = vunpack.c.h.b16 %v439
        %v748 = vunpack.c.l.b16 %v440
        %v749 = vunpack.c.l.b16 %v441
        %v750 = vunpack.c.h.b16 %v441
        %v751 = vunpack.c.l.b16 %v442
        %v752 = vunpack.c.l.b16 %v443
        %v753 = vunpack.c.h.b16 %v443
        %v754 = vunpack.c.l.b16 %v444
        %v755 = vunpack.c.l.b16 %v445
        %v756 = vunpack.c.h.b16 %v445
        %v757 = vunpack.c.l.b16 %v446
        %v758 = vunpack.c.l.b16 %v447
        %v759 = vunpack.c.h.b16 %v447
        %v760 = vunpack.c.l.b16 %v448
        %v761 = vunpack.c.l.b16 %v449
        %v762 = vunpack.c.h.b16 %v449
        %v763 = vunpack.c.l.b16 %v450
        %v764 = vunpack.c.l.b16 %v451
        %v765 = vunpack.c.h.b16 %v451
        %v766 = vunpack.c.l.b16 %v452
        %v767 = vunpack.c.l.b16 %v453
        %v768 = vunpack.c.h.b16 %v453
        %v769 = vunpack.c.l.b16 %v454
        %v770 = vunpack.c.l.b16 %v455
        %v771 = vunpack.c.h.b16 %v455
        %v772 = vunpack.c.l.b16 %v456
        %v773 = vunpack.c.l.b16 %v457
        %v774 = vunpack.c.h.b16 %v457
        %v775 = vunpack.c.l.b16 %v458
        %v776 = vunpack.c.l.b16 %v459
        %v777 = vunpack.c.h.b16 %v459
        %v778 = vunpack.c.l.b16 %v460
        %v779 = vunpack.c.l.b16 %v461
        %v780 = vunpack.c.h.b16 %v461
        %v781 = vunpack.c.l.b16 %v462
        %v782 = vunpack.c.l.b16 %v463
        %v783 = vunpack.c.h.b16 %v463
        %v784 = vunpack.c.l.b16 %v464
        %v785 = vunpack.c.l.b16 %v465
        %v786 = vunpack.c.h.b16 %v465
        %v787 = vunpack.c.l.b16 %v466
        %v788 = vunpack.c.l.b16 %v467
        %v789 = vunpack.c.h.b16 %v467
        %v790 = vunpack.c.l.b16 %v468
        %v791 = vunpack.c.l.b16 %v469
        %v792 = vunpack.c.h.b16 %v469
        %v793 = vunpack.c.l.b16 %v470
        %v794 = vunpack.c.l.b16 %v471
        %v795 = vunpack.c.h.b16 %v471
        %v796 = vunpack.c.l.b16 %v472
        %v797 = vunpack.c.l.b16 %v473
        %v798 = vunpack.c.h.b16 %v473
        %v799 = vunpack.c.l.b16 %v474
        %v800 = vunpack.c.l.b16 %v475
        %v801 = vunpack.c.h.b16 %v475
        %v802 = vunpack.c.l.b16 %v476
        %v803 = vunpack.c.l.b16 %v477
        %v804 = vunpack.c.h.b16 %v477
        %v805 = vunpack.c.l.b16 %v478
        %v806 = vunpack.c.l.b16 %v479
        %v807 = vunpack.c.h.b16 %v479
        %v808 = vunpack.c.l.b16 %v480
        %v809 = vunpack.c.l.b16 %v481
        %v810 = vunpack.c.h.b16 %v481
        %v811 = vunpack.c.l.b16 %v482
        %v812 = vunpack.c.l.b16 %v483
        %v813 = vunpack.c.h.b16 %v483
        %v814 = vunpack.c.l.b16 %v484
        %v815 = vunpack.c.l.b16 %v485
        %v816 = vunpack.c.h.b16 %v485
        %v817 = vunpack.c.l.b16 %v486
        %v818 = vunpack.c.l.b16 %v487
        %v819 = vunpack.c.h.b16 %v487
        %v820 = vunpack.c.l.b16 %v488
        %v821 = vunpack.c.l.b16 %v489
        %v822 = vunpack.c.h.b16 %v489
        %v823 = vunpack.c.l.b16 %v490
        %v824 = vunpack.c.l.b16 %v491
        %v825 = vunpack.c.h.b16 %v491
        %v826 = vunpack.c.l.b16 %v492
        %v827 = vunpack.c.l.b16 %v493
        %v828 = vunpack.c.h.b16 %v493
        %v829 = vunpack.c.l.b16 %v494
        %v830 = vunpack.c.l.b16 %v495
        %v831 = vunpack.c.h.b16 %v495
        %v832 = vunpack.c.l.b16 %v496
        %v833 = vunpack.c.l.b16 %v497
        %v834 = vunpack.c.h.b16 %v497
        %v835 = vunpack.c.l.b16 %v498
        %v836 = vunpack.c.l.b16 %v499
        %v837 = vunpack.c.h.b16 %v499
        %v838 = vunpack.c.l.b16 %v500
        %v839 = vunpack.c.l.b16 %v501
        %v840 = vunpack.c.h.b16 %v501
        %v841 = vunpack.c.l.b16 %v502
        %v842 = vunpack.c.l.b16 %v503
        %v843 = vunpack.c.h.b16 %v503
        %v844 = vunpack.c.l.b16 %v504
        %v845 = vunpack.c.l.b16 %v505
        %v846 = vunpack.c.h.b16 %v505
        %v847 = vunpack.c.l.b16 %v506
        %v848 = vunpack.c.l.b16 %v507
        %v849 = vunpack.c.h.b16 %v507
        %v850 = vunpack.c.l.b16 %v508
        %v851 = vunpack.c.l.b16 %v509
        %v852 = vunpack.c.h.b16 %v509
        %v853 = vunpack.c.l.b16 %v510
        %v854 = vunpack.c.l.b16 %v511
        %v855 = vunpack.c.h.b16 %v511
        %v856 = vunpack.c.l.b16 %v512
        %v857 = vunpack.c.l.b16 %v513
        %v858 = vunpack.c.h.b16 %v513
        %v859 = vunpack.c.l.b16 %v514
        %v860 = vunpack.c.l.b16 %v515
        %v861 = vunpack.c.h.b16 %v515
        %v862 = vunpack.c.l.b16 %v516
        %v863 = vunpack.c.l.b16 %v517
        %v864 = vunpack.c.h.b16 %v517
        %v865 = vunpack.c.l.b16 %v518
        %v866 = vunpack.c.l.b16 %v519
        %v867 = vunpack.c.h.b16 %v519
        %v868 = vunpack.c.l.b16 %v520
        %v869 = vunpack.c.l.b16 %v521
        %v870 = vunpack.c.h.b16 %v521
        %v871 = vunpack.c.l.b16 %v522
        %v872 = vunpack.c.l.b16 %v523
        %v873 = vunpack.c.h.b16 %v523
        %v874 = vunpack.c.l.b16 %v524
        %v875 = vunpack.c.l.b16 %v525
        %v876 = vunpack.c.h.b16 %v525
        %v877 = vunpack.c.l.b16 %v526
        %v878 = vunpack.c.l.b16 %v527
        %v879 = vunpack.c.h.b16 %v527
        %v880 = vunpack.c.l.b16 %v528
        %v881 = vunpack.c.l.b16 %v529
        %v882 = vunpack.c.h.b16 %v529
        %v883 = vunpack.c.l.b16 %v530
        %v884 = vunpack.c.l.b16 %v531
        %v885 = vunpack.c.h.b16 %v531
        %v886 = vunpack.c.l.b16 %v532
        %v887 = vunpack.c.l.b16 %v533
        %v888 = vunpack.c.h.b16 %v533
        %v889 = vunpack.c.l.b16 %v534
        %v890 = vunpack.c.l.b16 %v535
        %v891 = vunpack.c.h.b16 %v535
        %v892 = vunpack.c.l.b16 %v536
        %v893 = vunpack.c.l.b16 %v537
        %v894 = vunpack.c.h.b16 %v537
        %v895 = vunpack.c.l.b16 %v538
        %v896 = vunpack.c.l.b16 %v539
        %v897 = vunpack.c.h.b16 %v539
        %v898 = vunpack.c.l.b16 %v540
        %v899 = vunpack.c.l.b16 %v541
        %v900 = vunpack.c.h.b16 %v541
        %v901 = vunpack.c.l.b16 %v542
        %v902 = vunpack.c.l.b16 %v543
        %v903 = vunpack.c.h.b16 %v543
        %v904 = vunpack.c.l.b16 %v544
        %v905 = vunpack.c.l.b16 %v545
        %v906 = vunpack.c.h.b16 %v545
        %v907 = vunpack.c.l.b16 %v546
        %v908 = vunpack.c.l.b16 %v547
        %v909 = vunpack.c.h.b16 %v547
        %v910 = vunpack.c.l.b16 %v548
        %v911 = vunpack.c.l.b16 %v549
        %v912 = vunpack.c.h.b16 %v549
        %v913 = vunpack.c.l.b16 %v550
        %v914 = vunpack.c.l.b16 %v551
        %v915 = vunpack.c.h.b16 %v551
        %v916 = vunpack.c.l.b16 %v552
        %v917 = vunpack.c.l.b16 %v553
        %v918 = vunpack.c.h.b16 %v553
        %v919 = vunpack.c.l.b16 %v554
        %v920 = vunpack.c.l.b16 %v555
        %v921 = vunpack.c.h.b16 %v555
        %v922 = vunpack.c.l.b16 %v556
        %v923 = vunpack.c.l.b16 %v557
        %v924 = vunpack.c.h.b16 %v557
        %v925 = vunpack.c.l.b16 %v558
        %v926 = vunpack.c.l.b16 %v559
        %v927 = vunpack.c.h.b16 %v559
        %v928 = vunpack.c.l.b16 %v560
        %v929 = vpack.c.b16 %v740, %v737
        %v930 = vpack.c.b16 %v741, %v738
        %v931 = vpack.c.b16 %v742, %v739
        %v932 = vpack.c.b16 %v746, %v743
        %v933 = vpack.c.b16 %v747, %v744
        %v934 = vpack.c.b16 %v748, %v745
        %v935 = vpack.c.b16 %v752, %v749
        %v936 = vpack.c.b16 %v753, %v750
        %v937 = vpack.c.b16 %v754, %v751
        %v938 = vpack.c.b16 %v758, %v755
        %v939 = vpack.c.b16 %v759, %v756
        %v940 = vpack.c.b16 %v760, %v757
        %v941 = vpack.c.b16 %v764, %v761
        %v942 = vpack.c.b16 %v765, %v762
        %v943 = vpack.c.b16 %v766, %v763
        %v944 = vpack.c.b16 %v770, %v767
        %v945 = vpack.c.b16 %v771, %v768
        %v946 = vpack.c.b16 %v772, %v769
        %v947 = vpack.c.b16 %v776, %v773
        %v948 = vpack.c.b16 %v777, %v774
        %v949 = vpack.c.b16 %v778, %v775
        %v950 = vpack.c.b16 %v782, %v779
        %v951 = vpack.c.b16 %v783, %v780
        %v952 = vpack.c.b16 %v784, %v781
        %v953 = vpack.c.b16 %v788, %v785
        %v954 = vpack.c.b16 %v789, %v786
        %v955 = vpack.c.b16 %v790, %v787
        %v956 = vpack.c.b16 %v794, %v791
        %v957 = vpack.c.b16 %v795, %v792
        %v958 = vpack.c.b16 %v796, %v793
        %v959 = vpack.c.b16 %v800, %v797
        %v960 = vpack.c.b16 %v801, %v798
        %v961 = vpack.c.b16 %v802, %v799
        %v962 = vpack.c.b16 %v806, %v803
        %v963 = vpack.c.b16 %v807, %v804
        %v964 = vpack.c.b16 %v808, %v805
        %v965 = vpack.c.b16 %v812, %v809
        %v966 = vpack.c.b16 %v813, %v810
        %v967 = vpack.c.b16 %v814, %v811
        %v968 = vpack.c.b16 %v818, %v815
        %v969 = vpack.c.b16 %v819, %v816
        %v970 = vpack.c.b16 %v820, %v817
        %v971 = vpack.c.b16 %v824, %v821
        %v972 = vpack.c.b16 %v825, %v822
        %v973 = vpack.c.b16 %v826, %v823
        %v974 = vpack.c.b16 %v830, %v827
        %v975 = vpack.c.b16 %v831, %v828
        %v976 = vpack.c.b16 %v832, %v829
        %v977 = vpack.c.b16 %v836, %v833
        %v978 = vpack.c.b16 %v837, %v834
        %v979 = vpack.c.b16 %v838, %v835
        %v980 = vpack.c.b16 %v842, %v839
        %v981 = vpack.c.b16 %v843, %v840
        %v982 = vpack.c.b16 %v844, %v841
        %v983 = vpack.c.b16 %v848, %v845
        %v984 = vpack.c.b16 %v849, %v846
        %v985 = vpack.c.b16 %v850, %v847
        %v986 = vpack.c.b16 %v854, %v851
        %v987 = vpack.c.b16 %v855, %v852
        %v988 = vpack.c.b16 %v856, %v853
        %v989 = vpack.c.b16 %v860, %v857
        %v990 = vpack.c.b16 %v861, %v858
        %v991 = vpack.c.b16 %v862, %v859
        %v992 = vpack.c.b16 %v866, %v863
        %v993 = vpack.c.b16 %v867, %v864
        %v994 = vpack.c.b16 %v868, %v865
        %v995 = vpack.c.b16 %v872, %v869
        %v996 = vpack.c.b16 %v873, %v870
        %v997 = vpack.c.b16 %v874, %v871
        %v998 = vpack.c.b16 %v878, %v875
        %v999 = vpack.c.b16 %v879, %v876
        %v1000 = vpack.c.b16 %v880, %v877
        %v1001 = vpack.c.b16 %v884, %v881
        %v1002 = vpack.c.b16 %v885, %v882
        %v1003 = vpack.c.b16 %v886, %v883
        %v1004 = vpack.c.b16 %v890, %v887
        %v1005 = vpack.c.b16 %v891, %v888
        %v1006 = vpack.c.b16 %v892, %v889
        %v1007 = vpack.c.b16 %v896, %v893
        %v1008 = vpack.c.b16 %v897, %v894
        %v1009 = vpack.c.b16 %v898, %v895
        %v1010 = vpack.c.b16 %v902, %v899
        %v1011 = vpack.c.b16 %v903, %v900
        %v1012 = vpack.c.b16 %v904, %v901
        %v1013 = vpack.c.b16 %v908, %v905
        %v1014 = vpack.c.b16 %v909, %v906
        %v1015 = vpack.c.b16 %v910, %v907
        %v1016 = vpack.c.b16 %v914, %v911
        %v1017 = vpack.c.b16 %v915, %v912
        %v1018 = vpack.c.b16 %v916, %v913
        %v1019 = vpack.c.b16 %v920, %v917
        %v1020 = vpack.c.b16 %v921, %v918
        %v1021 = vpack.c.b16 %v922, %v919
        %v1022 = vpack.c.b16 %v926, %v923
        %v1023 = vpack.c.b16 %v927, %v924
        %v1024 = vpack.c.b16 %v928, %v925
        %v1169 = vunpack.c.l.b16 %v561
        %v1170 = vunpack.c.l.b16 %v562
        %v1171 = vunpack.c.l.b16 %v563
        %v1172 = vunpack.c.l.b16 %v564
        %v1173 = vunpack.c.l.b16 %v565
        %v1174 = vunpack.c.l.b16 %v566
        %v1175 = vunpack.c.l.b16 %v567
        %v1176 = vunpack.c.l.b16 %v568
        %v1177 = vunpack.c.l.b16 %v569
        %v1178 = vunpack.c.l.b16 %v570
        %v1179 = vunpack.c.l.b16 %v571
        %v1180 = vunpack.c.l.b16 %v572
        %v1181 = vunpack.c.l.b16 %v573
        %v1182 = vunpack.c.l.b16 %v574
        %v1183 = vunpack.c.l.b16 %v575
        %v1184 = vunpack.c.l.b16 %v576
        %v1185 = vunpack.c.l.b16 %v577
        %v1186 = vunpack.c.l.b16 %v578
        %v1187 = vunpack.c.l.b16 %v579
        %v1188 = vunpack.c.l.b16 %v580
        %v1189 = vunpack.c.l.b16 %v581
        %v1190 = vunpack.c.l.b16 %v582
        %v1191 = vunpack.c.l.b16 %v583
        %v1192 = vunpack.c.l.b16 %v584
        %v1193 = vunpack.c.l.b16 %v585
        %v1194 = vunpack.c.l.b16 %v586
        %v1195 = vunpack.c.l.b16 %v587
        %v1196 = vunpack.c.l.b16 %v588
        %v1197 = vunpack.c.l.b16 %v589
        %v1198 = vunpack.c.l.b16 %v590
        %v1199 = vunpack.c.l.b16 %v591
        %v1200 = vunpack.c.l.b16 %v592
        %v1201 = vunpack.c.l.b16 %v593
        %v1202 = vunpack.c.l.b16 %v594
        %v1203 = vunpack.c.l.b16 %v595
        %v1204 = vunpack.c.l.b16 %v596
        %v1205 = vunpack.c.l.b16 %v597
        %v1206 = vunpack.c.l.b16 %v598
        %v1207 = vunpack.c.l.b16 %v599
        %v1208 = vunpack.c.l.b16 %v600
        %v1209 = vunpack.c.l.b16 %v601
        %v1210 = vunpack.c.l.b16 %v602
        %v1211 = vunpack.c.l.b16 %v603
        %v1212 = vunpack.c.l.b16 %v604
        %v1213 = vunpack.c.l.b16 %v605
        %v1214 = vunpack.c.l.b16 %v606
        %v1215 = vunpack.c.l.b16 %v607
        %v1216 = vunpack.c.l.b16 %v608
        %v1217 = vpack.c.b16 %v1170, %v1169
        %v1218 = vpack.c.b16 %v1172, %v1171
        %v1219 = vpack.c.b16 %v1174, %v1173
        %v1220 = vpack.c.b16 %v1176, %v1175
        %v1221 = vpack.c.b16 %v1178, %v1177
        %v1222 = vpack.c.b16 %v1180, %v1179
        %v1223 = vpack.c.b16 %v1182, %v1181
        %v1224 = vpack.c.b16 %v1184, %v1183
        %v1225 = vpack.c.b16 %v1186, %v1185
        %v1226 = vpack.c.b16 %v1188, %v1187
        %v1227 = vpack.c.b16 %v1190, %v1189
        %v1228 = vpack.c.b16 %v1192, %v1191
        %v1229 = vpack.c.b16 %v1194, %v1193
        %v1230 = vpack.c.b16 %v1196, %v1195
        %v1231 = vpack.c.b16 %v1198, %v1197
        %v1232 = vpack.c.b16 %v1200, %v1199
        %v1233 = vpack.c.b16 %v1202, %v1201
        %v1234 = vpack.c.b16 %v1204, %v1203
        %v1235 = vpack.c.b16 %v1206, %v1205
        %v1236 = vpack.c.b16 %v1208, %v1207
        %v1237 = vpack.c.b16 %v1210, %v1209
        %v1238 = vpack.c.b16 %v1212, %v1211
        %v1239 = vpack.c.b16 %v1214, %v1213
        %v1240 = vpack.c.b16 %v1216, %v1215
        %1265 = vmatprep.subr.bf16.mxu0 0
        %1266 = vmatpush1.bf16.msra.mxu0 %v1217
        %1267 = vmatprep.subr.bf16.mxu0 0
        %1268 = vmatpush1.bf16.msra.mxu0 %v1218
        %1269 = vmatprep.subr.bf16.mxu0 0
        %1270 = vmatpush1.bf16.msra.mxu0 %v1219
        %1271 = vmatprep.subr.bf16.mxu0 0
        %1272 = vmatpush1.bf16.msra.mxu0 %v1220
        %1273 = vmatprep.subr.bf16.mxu0 0
        %1274 = vmatpush1.bf16.msra.mxu0 %v1221
        %1275 = vmatprep.subr.bf16.mxu0 0
        %1276 = vmatpush1.bf16.msra.mxu0 %v1222
        %1277 = vmatprep.subr.bf16.mxu0 0
        %1278 = vmatpush1.bf16.msra.mxu0 %v1223
        %1279 = vmatprep.subr.bf16.mxu0 0
        %1280 = vmatpush1.bf16.msra.mxu0 %v1224
        %1281 = vmatprep.subr.bf16.mxu0 0
        %1282 = vmatpush1.bf16.msra.mxu0 %v1225
        %1283 = vmatprep.subr.bf16.mxu0 0
        %1284 = vmatpush1.bf16.msra.mxu0 %v1226
        %1285 = vmatprep.subr.bf16.mxu0 0
        %1286 = vmatpush1.bf16.msra.mxu0 %v1227
        %1287 = vmatprep.subr.bf16.mxu0 0
        %1288 = vmatpush1.bf16.msra.mxu0 %v1228
        %1289 = vmatprep.subr.bf16.mxu0 0
        %1290 = vmatpush1.bf16.msra.mxu0 %v1229
        %1291 = vmatprep.subr.bf16.mxu0 0
        %1292 = vmatpush1.bf16.msra.mxu0 %v1230
        %1293 = vmatprep.subr.bf16.mxu0 0
        %1294 = vmatpush1.bf16.msra.mxu0 %v1231
        %1295 = vmatprep.subr.bf16.mxu0 0
        %1296 = vmatpush1.bf16.msra.mxu0 %v1232
        %1297 = vmatprep.mubr.bf16.mxu0 %v930
        %1298 = vmatmul.mubr.bf16.gmra.mrb[0].mxu0 %v929
        %v1299 = vpop.f32.mrb[0].mxu0
        %v1300 = vadd.f32 0.0, %v1299
        %v1301 = vpop.f32.mrb[0].mxu0
        %v1302 = vpop.f32.mrb[0].mxu0
        %v1303 = vadd.f32 0.0, %v1302
        %v1304 = vpop.f32.mrb[0].mxu0
        %1305 = vmatprep.mubr.bf16.mxu0 %v933
        %1306 = vmatmul.mubr.bf16.gmra.mrb[0].mxu0 %v932
        %v1307 = vpop.f32.mrb[0].mxu0
        %v1308 = vadd.f32 0.0, %v1307
        %v1309 = vpop.f32.mrb[0].mxu0
        %v1310 = vpop.f32.mrb[0].mxu0
        %v1311 = vadd.f32 0.0, %v1310
        %v1312 = vpop.f32.mrb[0].mxu0
        %1313 = vmatprep.mubr.bf16.mxu0 %v936
        %1314 = vmatmul.mubr.bf16.gmra.mrb[0].mxu0 %v935
        %v1315 = vpop.f32.mrb[0].mxu0
        %v1316 = vadd.f32 0.0, %v1315
        %v1317 = vpop.f32.mrb[0].mxu0
        %v1318 = vpop.f32.mrb[0].mxu0
        %v1319 = vadd.f32 0.0, %v1318
        %v1320 = vpop.f32.mrb[0].mxu0
        %1321 = vmatprep.mubr.bf16.mxu0 %v939
        %1322 = vmatmul.mubr.bf16.gmra.mrb[0].mxu0 %v938
        %v1323 = vpop.f32.mrb[0].mxu0
        %v1324 = vadd.f32 0.0, %v1323
        %v1325 = vpop.f32.mrb[0].mxu0
        %v1326 = vpop.f32.mrb[0].mxu0
        %v1327 = vadd.f32 0.0, %v1326
        %v1328 = vpop.f32.mrb[0].mxu0
        %1329 = vmatprep.mubr.bf16.mxu0 %v942
        %1330 = vmatmul.mubr.bf16.gmra.mrb[0].mxu0 %v941
        %v1331 = vpop.f32.mrb[0].mxu0
        %v1332 = vadd.f32 0.0, %v1331
        %v1333 = vpop.f32.mrb[0].mxu0
        %v1334 = vpop.f32.mrb[0].mxu0
        %v1335 = vadd.f32 0.0, %v1334
        %v1336 = vpop.f32.mrb[0].mxu0
        %1337 = vmatprep.mubr.bf16.mxu0 %v945
        %1338 = vmatmul.mubr.bf16.gmra.mrb[0].mxu0 %v944
        %v1339 = vpop.f32.mrb[0].mxu0
        %v1340 = vadd.f32 0.0, %v1339
        %v1341 = vpop.f32.mrb[0].mxu0
        %v1342 = vpop.f32.mrb[0].mxu0
        %v1343 = vadd.f32 0.0, %v1342
        %v1344 = vpop.f32.mrb[0].mxu0
        %1345 = vmatprep.mubr.bf16.mxu0 %v948
        %1346 = vmatmul.mubr.bf16.gmra.mrb[0].mxu0 %v947
        %v1347 = vpop.f32.mrb[0].mxu0
        %v1348 = vadd.f32 0.0, %v1347
        %v1349 = vpop.f32.mrb[0].mxu0
        %v1350 = vpop.f32.mrb[0].mxu0
        %v1351 = vadd.f32 0.0, %v1350
        %v1352 = vpop.f32.mrb[0].mxu0
        %1353 = vmatprep.mubr.bf16.mxu0 %v951
        %1354 = vmatmul.mubr.bf16.gmra.mrb[0].mxu0 %v950
        %v1355 = vpop.f32.mrb[0].mxu0
        %v1356 = vadd.f32 0.0, %v1355
        %v1357 = vpop.f32.mrb[0].mxu0
        %v1358 = vpop.f32.mrb[0].mxu0
        %v1359 = vadd.f32 0.0, %v1358
        %v1360 = vpop.f32.mrb[0].mxu0
        %1361 = vmatprep.mubr.bf16.mxu0 %v954
        %1362 = vmatmul.mubr.bf16.gmra.mrb[0].mxu0 %v953
        %v1363 = vpop.f32.mrb[0].mxu0
        %v1364 = vadd.f32 0.0, %v1363
        %v1365 = vpop.f32.mrb[0].mxu0
        %v1366 = vpop.f32.mrb[0].mxu0
        %v1367 = vadd.f32 0.0, %v1366
        %v1368 = vpop.f32.mrb[0].mxu0
        %1369 = vmatprep.mubr.bf16.mxu0 %v957
        %1370 = vmatmul.mubr.bf16.gmra.mrb[0].mxu0 %v956
        %v1371 = vpop.f32.mrb[0].mxu0
        %v1372 = vadd.f32 0.0, %v1371
        %v1373 = vpop.f32.mrb[0].mxu0
        %v1374 = vpop.f32.mrb[0].mxu0
        %v1375 = vadd.f32 0.0, %v1374
        %v1376 = vpop.f32.mrb[0].mxu0
        %1377 = vmatprep.mubr.bf16.mxu0 %v960
        %1378 = vmatmul.mubr.bf16.gmra.mrb[0].mxu0 %v959
        %v1379 = vpop.f32.mrb[0].mxu0
        %v1380 = vadd.f32 0.0, %v1379
        %v1381 = vpop.f32.mrb[0].mxu0
        %v1382 = vpop.f32.mrb[0].mxu0
        %v1383 = vadd.f32 0.0, %v1382
        %v1384 = vpop.f32.mrb[0].mxu0
        %1385 = vmatprep.mubr.bf16.mxu0 %v963
        %1386 = vmatmul.mubr.bf16.gmra.mrb[0].mxu0 %v962
        %v1387 = vpop.f32.mrb[0].mxu0
        %v1388 = vadd.f32 0.0, %v1387
        %v1389 = vpop.f32.mrb[0].mxu0
        %v1390 = vpop.f32.mrb[0].mxu0
        %v1391 = vadd.f32 0.0, %v1390
        %v1392 = vpop.f32.mrb[0].mxu0
        %1393 = vmatprep.mubr.bf16.mxu0 %v966
        %1394 = vmatmul.mubr.bf16.gmra.mrb[0].mxu0 %v965
        %v1395 = vpop.f32.mrb[0].mxu0
        %v1396 = vadd.f32 0.0, %v1395
        %v1397 = vpop.f32.mrb[0].mxu0
        %v1398 = vpop.f32.mrb[0].mxu0
        %v1399 = vadd.f32 0.0, %v1398
        %v1400 = vpop.f32.mrb[0].mxu0
        %1401 = vmatprep.mubr.bf16.mxu0 %v969
        %1402 = vmatmul.mubr.bf16.gmra.mrb[0].mxu0 %v968
        %v1403 = vpop.f32.mrb[0].mxu0
        %v1404 = vadd.f32 0.0, %v1403
        %v1405 = vpop.f32.mrb[0].mxu0
        %v1406 = vpop.f32.mrb[0].mxu0
        %v1407 = vadd.f32 0.0, %v1406
        %v1408 = vpop.f32.mrb[0].mxu0
        %1409 = vmatprep.mubr.bf16.mxu0 %v972
        %1410 = vmatmul.mubr.bf16.gmra.mrb[0].mxu0 %v971
        %v1411 = vpop.f32.mrb[0].mxu0
        %v1412 = vadd.f32 0.0, %v1411
        %v1413 = vpop.f32.mrb[0].mxu0
        %v1414 = vpop.f32.mrb[0].mxu0
        %v1415 = vadd.f32 0.0, %v1414
        %v1416 = vpop.f32.mrb[0].mxu0
        %1417 = vmatprep.mubr.bf16.mxu0 %v975
        %1418 = vmatmul.mubr.bf16.gmra.mrb[0].mxu0 %v974
        %v1419 = vpop.f32.mrb[0].mxu0
        %v1420 = vadd.f32 0.0, %v1419
        %v1421 = vpop.f32.mrb[0].mxu0
        %v1422 = vpop.f32.mrb[0].mxu0
        %v1423 = vadd.f32 0.0, %v1422
        %v1424 = vpop.f32.mrb[0].mxu0
        %1425 = vmatprep.mubr.bf16.mxu0 %v978
        %1426 = vmatmul.mubr.bf16.gmra.mrb[0].mxu0 %v977
        %v1427 = vpop.f32.mrb[0].mxu0
        %v1428 = vadd.f32 0.0, %v1427
        %v1429 = vpop.f32.mrb[0].mxu0
        %v1430 = vpop.f32.mrb[0].mxu0
        %v1431 = vadd.f32 0.0, %v1430
        %v1432 = vpop.f32.mrb[0].mxu0
        %1433 = vmatprep.mubr.bf16.mxu0 %v981
        %1434 = vmatmul.mubr.bf16.gmra.mrb[0].mxu0 %v980
        %v1435 = vpop.f32.mrb[0].mxu0
        %v1436 = vadd.f32 0.0, %v1435
        %v1437 = vpop.f32.mrb[0].mxu0
        %v1438 = vpop.f32.mrb[0].mxu0
        %v1439 = vadd.f32 0.0, %v1438
        %v1440 = vpop.f32.mrb[0].mxu0
        %1441 = vmatprep.mubr.bf16.mxu0 %v984
        %1442 = vmatmul.mubr.bf16.gmra.mrb[0].mxu0 %v983
        %v1443 = vpop.f32.mrb[0].mxu0
        %v1444 = vadd.f32 0.0, %v1443
        %v1445 = vpop.f32.mrb[0].mxu0
        %v1446 = vpop.f32.mrb[0].mxu0
        %v1447 = vadd.f32 0.0, %v1446
        %v1448 = vpop.f32.mrb[0].mxu0
        %1449 = vmatprep.mubr.bf16.mxu0 %v987
        %1450 = vmatmul.mubr.bf16.gmra.mrb[0].mxu0 %v986
        %v1451 = vpop.f32.mrb[0].mxu0
        %v1452 = vadd.f32 0.0, %v1451
        %v1453 = vpop.f32.mrb[0].mxu0
        %v1454 = vpop.f32.mrb[0].mxu0
        %v1455 = vadd.f32 0.0, %v1454
        %v1456 = vpop.f32.mrb[0].mxu0
        %1457 = vmatprep.mubr.bf16.mxu0 %v990
        %1458 = vmatmul.mubr.bf16.gmra.mrb[0].mxu0 %v989
        %v1459 = vpop.f32.mrb[0].mxu0
        %v1460 = vadd.f32 0.0, %v1459
        %v1461 = vpop.f32.mrb[0].mxu0
        %v1462 = vpop.f32.mrb[0].mxu0
        %v1463 = vadd.f32 0.0, %v1462
        %v1464 = vpop.f32.mrb[0].mxu0
        %1465 = vmatprep.mubr.bf16.mxu0 %v993
        %1466 = vmatmul.mubr.bf16.gmra.mrb[0].mxu0 %v992
        %v1467 = vpop.f32.mrb[0].mxu0
        %v1468 = vadd.f32 0.0, %v1467
        %v1469 = vpop.f32.mrb[0].mxu0
        %v1470 = vpop.f32.mrb[0].mxu0
        %v1471 = vadd.f32 0.0, %v1470
        %v1472 = vpop.f32.mrb[0].mxu0
        %1473 = vmatprep.mubr.bf16.mxu0 %v996
        %1474 = vmatmul.mubr.bf16.gmra.mrb[0].mxu0 %v995
        %v1475 = vpop.f32.mrb[0].mxu0
        %v1476 = vadd.f32 0.0, %v1475
        %v1477 = vpop.f32.mrb[0].mxu0
        %v1478 = vpop.f32.mrb[0].mxu0
        %v1479 = vadd.f32 0.0, %v1478
        %v1480 = vpop.f32.mrb[0].mxu0
        %1481 = vmatprep.mubr.bf16.mxu0 %v999
        %1482 = vmatmul.mubr.bf16.gmra.mrb[0].mxu0 %v998
        %v1483 = vpop.f32.mrb[0].mxu0
        %v1484 = vadd.f32 0.0, %v1483
        %v1485 = vpop.f32.mrb[0].mxu0
        %v1486 = vpop.f32.mrb[0].mxu0
        %v1487 = vadd.f32 0.0, %v1486
        %v1488 = vpop.f32.mrb[0].mxu0
        %1489 = vmatprep.mubr.bf16.mxu0 %v1002
        %1490 = vmatmul.mubr.bf16.gmra.mrb[0].mxu0 %v1001
        %v1491 = vpop.f32.mrb[0].mxu0
        %v1492 = vadd.f32 0.0, %v1491
        %v1493 = vpop.f32.mrb[0].mxu0
        %v1494 = vpop.f32.mrb[0].mxu0
        %v1495 = vadd.f32 0.0, %v1494
        %v1496 = vpop.f32.mrb[0].mxu0
        %1497 = vmatprep.mubr.bf16.mxu0 %v1005
        %1498 = vmatmul.mubr.bf16.gmra.mrb[0].mxu0 %v1004
        %v1499 = vpop.f32.mrb[0].mxu0
        %v1500 = vadd.f32 0.0, %v1499
        %v1501 = vpop.f32.mrb[0].mxu0
        %v1502 = vpop.f32.mrb[0].mxu0
        %v1503 = vadd.f32 0.0, %v1502
        %v1504 = vpop.f32.mrb[0].mxu0
        %1505 = vmatprep.mubr.bf16.mxu0 %v1008
        %1506 = vmatmul.mubr.bf16.gmra.mrb[0].mxu0 %v1007
        %v1507 = vpop.f32.mrb[0].mxu0
        %v1508 = vadd.f32 0.0, %v1507
        %v1509 = vpop.f32.mrb[0].mxu0
        %v1510 = vpop.f32.mrb[0].mxu0
        %v1511 = vadd.f32 0.0, %v1510
        %v1512 = vpop.f32.mrb[0].mxu0
        %1513 = vmatprep.mubr.bf16.mxu0 %v1011
        %1514 = vmatmul.mubr.bf16.gmra.mrb[0].mxu0 %v1010
        %v1515 = vpop.f32.mrb[0].mxu0
        %v1516 = vadd.f32 0.0, %v1515
        %v1517 = vpop.f32.mrb[0].mxu0
        %v1518 = vpop.f32.mrb[0].mxu0
        %v1519 = vadd.f32 0.0, %v1518
        %v1520 = vpop.f32.mrb[0].mxu0
        %1521 = vmatprep.mubr.bf16.mxu0 %v1014
        %1522 = vmatmul.mubr.bf16.gmra.mrb[0].mxu0 %v1013
        %v1523 = vpop.f32.mrb[0].mxu0
        %v1524 = vadd.f32 0.0, %v1523
        %v1525 = vpop.f32.mrb[0].mxu0
        %v1526 = vpop.f32.mrb[0].mxu0
        %v1527 = vadd.f32 0.0, %v1526
        %v1528 = vpop.f32.mrb[0].mxu0
        %1529 = vmatprep.mubr.bf16.mxu0 %v1017
        %1530 = vmatmul.mubr.bf16.gmra.mrb[0].mxu0 %v1016
        %v1531 = vpop.f32.mrb[0].mxu0
        %v1532 = vadd.f32 0.0, %v1531
        %v1533 = vpop.f32.mrb[0].mxu0
        %v1534 = vpop.f32.mrb[0].mxu0
        %v1535 = vadd.f32 0.0, %v1534
        %v1536 = vpop.f32.mrb[0].mxu0
        %1537 = vmatprep.mubr.bf16.mxu0 %v1020
        %1538 = vmatmul.mubr.bf16.gmra.mrb[0].mxu0 %v1019
        %v1539 = vpop.f32.mrb[0].mxu0
        %v1540 = vadd.f32 0.0, %v1539
        %v1541 = vpop.f32.mrb[0].mxu0
        %v1542 = vpop.f32.mrb[0].mxu0
        %v1543 = vadd.f32 0.0, %v1542
        %v1544 = vpop.f32.mrb[0].mxu0
        %1545 = vmatprep.mubr.bf16.mxu0 %v1023
        %1546 = vmatmul.mubr.bf16.gmra.mrb[0].mxu0 %v1022
        %v1547 = vpop.f32.mrb[0].mxu0
        %v1548 = vadd.f32 0.0, %v1547
        %v1549 = vpop.f32.mrb[0].mxu0
        %v1550 = vpop.f32.mrb[0].mxu0
        %v1551 = vadd.f32 0.0, %v1550
        %v1552 = vpop.f32.mrb[0].mxu0
        %1553 = vdwg.mxu0
        %1554 = vmatprep.subr.bf16.mxu0 0
        %1555 = vmatpush1.bf16.msra.mxu0 %v1233
        %1556 = vmatprep.subr.bf16.mxu0 0
        %1557 = vmatpush1.bf16.msra.mxu0 %v1234
        %1558 = vmatprep.subr.bf16.mxu0 0
        %1559 = vmatpush1.bf16.msra.mxu0 %v1235
        %1560 = vmatprep.subr.bf16.mxu0 0
        %1561 = vmatpush1.bf16.msra.mxu0 %v1236
        %1562 = vmatprep.subr.bf16.mxu0 0
        %1563 = vmatpush1.bf16.msra.mxu0 %v1237
        %1564 = vmatprep.subr.bf16.mxu0 0
        %1565 = vmatpush1.bf16.msra.mxu0 %v1238
        %1566 = vmatprep.subr.bf16.mxu0 0
        %1567 = vmatpush1.bf16.msra.mxu0 %v1239
        %1568 = vmatprep.subr.bf16.mxu0 0
        %1569 = vmatpush1.bf16.msra.mxu0 %v1240
        %1570 = vmatprep.subr.bf16.mxu0 0
        %1571 = vmatpush1.bf16.msra.mxu0 0
        %1572 = vmatprep.subr.bf16.mxu0 0
        %1573 = vmatpush1.bf16.msra.mxu0 0
        %1574 = vmatprep.subr.bf16.mxu0 0
        %1575 = vmatpush1.bf16.msra.mxu0 0
        %1576 = vmatprep.subr.bf16.mxu0 0
        %1577 = vmatpush1.bf16.msra.mxu0 0
        %1578 = vmatprep.subr.bf16.mxu0 0
        %1579 = vmatpush1.bf16.msra.mxu0 0
        %1580 = vmatprep.subr.bf16.mxu0 0
        %1581 = vmatpush1.bf16.msra.mxu0 0
        %1582 = vmatprep.subr.bf16.mxu0 0
        %1583 = vmatpush1.bf16.msra.mxu0 0
        %1584 = vmatprep.subr.bf16.mxu0 0
        %1585 = vmatpush1.bf16.msra.mxu0 0
        %1586 = vmatprep.mubr.bf16.mxu0 0
        %1587 = vmatmul.mubr.bf16.gmra.mrb[0].mxu0 %v931
        %v1588 = vpop.f32.mrb[0].mxu0
        %v1589 = vadd.f32 %v1300, %v1588
        %v1590 = vpop.f32.mrb[0].mxu0
        %v1591 = vpop.f32.mrb[0].mxu0
        %v1592 = vadd.f32 %v1303, %v1591
        %v1593 = vpop.f32.mrb[0].mxu0
        %1594 = vmatprep.mubr.bf16.mxu0 0
        %1595 = vmatmul.mubr.bf16.gmra.mrb[0].mxu0 %v934
        %v1596 = vpop.f32.mrb[0].mxu0
        %v1597 = vadd.f32 %v1308, %v1596
        %v1598 = vpop.f32.mrb[0].mxu0
        %v1599 = vpop.f32.mrb[0].mxu0
        %v1600 = vadd.f32 %v1311, %v1599
        %v1601 = vpop.f32.mrb[0].mxu0
        %1602 = vmatprep.mubr.bf16.mxu0 0
        %1603 = vmatmul.mubr.bf16.gmra.mrb[0].mxu0 %v937
        %v1604 = vpop.f32.mrb[0].mxu0
        %v1605 = vadd.f32 %v1316, %v1604
        %v1606 = vpop.f32.mrb[0].mxu0
        %v1607 = vpop.f32.mrb[0].mxu0
        %v1608 = vadd.f32 %v1319, %v1607
        %v1609 = vpop.f32.mrb[0].mxu0
        %1610 = vmatprep.mubr.bf16.mxu0 0
        %1611 = vmatmul.mubr.bf16.gmra.mrb[0].mxu0 %v940
        %v1612 = vpop.f32.mrb[0].mxu0
        %v1613 = vadd.f32 %v1324, %v1612
        %v1614 = vpop.f32.mrb[0].mxu0
        %v1615 = vpop.f32.mrb[0].mxu0
        %v1616 = vadd.f32 %v1327, %v1615
        %v1617 = vpop.f32.mrb[0].mxu0
        %1618 = vmatprep.mubr.bf16.mxu0 0
        %1619 = vmatmul.mubr.bf16.gmra.mrb[0].mxu0 %v943
        %v1620 = vpop.f32.mrb[0].mxu0
        %v1621 = vadd.f32 %v1332, %v1620
        %v1622 = vpop.f32.mrb[0].mxu0
        %v1623 = vpop.f32.mrb[0].mxu0
        %v1624 = vadd.f32 %v1335, %v1623
        %v1625 = vpop.f32.mrb[0].mxu0
        %1626 = vmatprep.mubr.bf16.mxu0 0
        %1627 = vmatmul.mubr.bf16.gmra.mrb[0].mxu0 %v946
        %v1628 = vpop.f32.mrb[0].mxu0
        %v1629 = vadd.f32 %v1340, %v1628
        %v1630 = vpop.f32.mrb[0].mxu0
        %v1631 = vpop.f32.mrb[0].mxu0
        %v1632 = vadd.f32 %v1343, %v1631
        %v1633 = vpop.f32.mrb[0].mxu0
        %1634 = vmatprep.mubr.bf16.mxu0 0
        %1635 = vmatmul.mubr.bf16.gmra.mrb[0].mxu0 %v949
        %v1636 = vpop.f32.mrb[0].mxu0
        %v1637 = vadd.f32 %v1348, %v1636
        %v1638 = vpop.f32.mrb[0].mxu0
        %v1639 = vpop.f32.mrb[0].mxu0
        %v1640 = vadd.f32 %v1351, %v1639
        %v1641 = vpop.f32.mrb[0].mxu0
        %1642 = vmatprep.mubr.bf16.mxu0 0
        %1643 = vmatmul.mubr.bf16.gmra.mrb[0].mxu0 %v952
        %v1644 = vpop.f32.mrb[0].mxu0
        %v1645 = vadd.f32 %v1356, %v1644
        %v1646 = vpop.f32.mrb[0].mxu0
        %v1647 = vpop.f32.mrb[0].mxu0
        %v1648 = vadd.f32 %v1359, %v1647
        %v1649 = vpop.f32.mrb[0].mxu0
        %1650 = vmatprep.mubr.bf16.mxu0 0
        %1651 = vmatmul.mubr.bf16.gmra.mrb[0].mxu0 %v955
        %v1652 = vpop.f32.mrb[0].mxu0
        %v1653 = vadd.f32 %v1364, %v1652
        %v1654 = vpop.f32.mrb[0].mxu0
        %v1655 = vpop.f32.mrb[0].mxu0
        %v1656 = vadd.f32 %v1367, %v1655
        %v1657 = vpop.f32.mrb[0].mxu0
        %1658 = vmatprep.mubr.bf16.mxu0 0
        %1659 = vmatmul.mubr.bf16.gmra.mrb[0].mxu0 %v958
        %v1660 = vpop.f32.mrb[0].mxu0
        %v1661 = vadd.f32 %v1372, %v1660
        %v1662 = vpop.f32.mrb[0].mxu0
        %v1663 = vpop.f32.mrb[0].mxu0
        %v1664 = vadd.f32 %v1375, %v1663
        %v1665 = vpop.f32.mrb[0].mxu0
        %1666 = vmatprep.mubr.bf16.mxu0 0
        %1667 = vmatmul.mubr.bf16.gmra.mrb[0].mxu0 %v961
        %v1668 = vpop.f32.mrb[0].mxu0
        %v1669 = vadd.f32 %v1380, %v1668
        %v1670 = vpop.f32.mrb[0].mxu0
        %v1671 = vpop.f32.mrb[0].mxu0
        %v1672 = vadd.f32 %v1383, %v1671
        %v1673 = vpop.f32.mrb[0].mxu0
        %1674 = vmatprep.mubr.bf16.mxu0 0
        %1675 = vmatmul.mubr.bf16.gmra.mrb[0].mxu0 %v964
        %v1676 = vpop.f32.mrb[0].mxu0
        %v1677 = vadd.f32 %v1388, %v1676
        %v1678 = vpop.f32.mrb[0].mxu0
        %v1679 = vpop.f32.mrb[0].mxu0
        %v1680 = vadd.f32 %v1391, %v1679
        %v1681 = vpop.f32.mrb[0].mxu0
        %1682 = vmatprep.mubr.bf16.mxu0 0
        %1683 = vmatmul.mubr.bf16.gmra.mrb[0].mxu0 %v967
        %v1684 = vpop.f32.mrb[0].mxu0
        %v1685 = vadd.f32 %v1396, %v1684
        %v1686 = vpop.f32.mrb[0].mxu0
        %v1687 = vpop.f32.mrb[0].mxu0
        %v1688 = vadd.f32 %v1399, %v1687
        %v1689 = vpop.f32.mrb[0].mxu0
        %1690 = vmatprep.mubr.bf16.mxu0 0
        %1691 = vmatmul.mubr.bf16.gmra.mrb[0].mxu0 %v970
        %v1692 = vpop.f32.mrb[0].mxu0
        %v1693 = vadd.f32 %v1404, %v1692
        %v1694 = vpop.f32.mrb[0].mxu0
        %v1695 = vpop.f32.mrb[0].mxu0
        %v1696 = vadd.f32 %v1407, %v1695
        %v1697 = vpop.f32.mrb[0].mxu0
        %1698 = vmatprep.mubr.bf16.mxu0 0
        %1699 = vmatmul.mubr.bf16.gmra.mrb[0].mxu0 %v973
        %v1700 = vpop.f32.mrb[0].mxu0
        %v1701 = vadd.f32 %v1412, %v1700
        %v1702 = vpop.f32.mrb[0].mxu0
        %v1703 = vpop.f32.mrb[0].mxu0
        %v1704 = vadd.f32 %v1415, %v1703
        %v1705 = vpop.f32.mrb[0].mxu0
        %1706 = vmatprep.mubr.bf16.mxu0 0
        %1707 = vmatmul.mubr.bf16.gmra.mrb[0].mxu0 %v976
        %v1708 = vpop.f32.mrb[0].mxu0
        %v1709 = vadd.f32 %v1420, %v1708
        %v1710 = vpop.f32.mrb[0].mxu0
        %v1711 = vpop.f32.mrb[0].mxu0
        %v1712 = vadd.f32 %v1423, %v1711
        %v1713 = vpop.f32.mrb[0].mxu0
        %1714 = vmatprep.mubr.bf16.mxu0 0
        %1715 = vmatmul.mubr.bf16.gmra.mrb[0].mxu0 %v979
        %v1716 = vpop.f32.mrb[0].mxu0
        %v1717 = vadd.f32 %v1428, %v1716
        %v1718 = vpop.f32.mrb[0].mxu0
        %v1719 = vpop.f32.mrb[0].mxu0
        %v1720 = vadd.f32 %v1431, %v1719
        %v1721 = vpop.f32.mrb[0].mxu0
        %1722 = vmatprep.mubr.bf16.mxu0 0
        %1723 = vmatmul.mubr.bf16.gmra.mrb[0].mxu0 %v982
        %v1724 = vpop.f32.mrb[0].mxu0
        %v1725 = vadd.f32 %v1436, %v1724
        %v1726 = vpop.f32.mrb[0].mxu0
        %v1727 = vpop.f32.mrb[0].mxu0
        %v1728 = vadd.f32 %v1439, %v1727
        %v1729 = vpop.f32.mrb[0].mxu0
        %1730 = vmatprep.mubr.bf16.mxu0 0
        %1731 = vmatmul.mubr.bf16.gmra.mrb[0].mxu0 %v985
        %v1732 = vpop.f32.mrb[0].mxu0
        %v1733 = vadd.f32 %v1444, %v1732
        %v1734 = vpop.f32.mrb[0].mxu0
        %v1735 = vpop.f32.mrb[0].mxu0
        %v1736 = vadd.f32 %v1447, %v1735
        %v1737 = vpop.f32.mrb[0].mxu0
        %1738 = vmatprep.mubr.bf16.mxu0 0
        %1739 = vmatmul.mubr.bf16.gmra.mrb[0].mxu0 %v988
        %v1740 = vpop.f32.mrb[0].mxu0
        %v1741 = vadd.f32 %v1452, %v1740
        %v1742 = vpop.f32.mrb[0].mxu0
        %v1743 = vpop.f32.mrb[0].mxu0
        %v1744 = vadd.f32 %v1455, %v1743
        %v1745 = vpop.f32.mrb[0].mxu0
        %1746 = vmatprep.mubr.bf16.mxu0 0
        %1747 = vmatmul.mubr.bf16.gmra.mrb[0].mxu0 %v991
        %v1748 = vpop.f32.mrb[0].mxu0
        %v1749 = vadd.f32 %v1460, %v1748
        %v1750 = vpop.f32.mrb[0].mxu0
        %v1751 = vpop.f32.mrb[0].mxu0
        %v1752 = vadd.f32 %v1463, %v1751
        %v1753 = vpop.f32.mrb[0].mxu0
        %1754 = vmatprep.mubr.bf16.mxu0 0
        %1755 = vmatmul.mubr.bf16.gmra.mrb[0].mxu0 %v994
        %v1756 = vpop.f32.mrb[0].mxu0
        %v1757 = vadd.f32 %v1468, %v1756
        %v1758 = vpop.f32.mrb[0].mxu0
        %v1759 = vpop.f32.mrb[0].mxu0
        %v1760 = vadd.f32 %v1471, %v1759
        %v1761 = vpop.f32.mrb[0].mxu0
        %1762 = vmatprep.mubr.bf16.mxu0 0
        %1763 = vmatmul.mubr.bf16.gmra.mrb[0].mxu0 %v997
        %v1764 = vpop.f32.mrb[0].mxu0
        %v1765 = vadd.f32 %v1476, %v1764
        %v1766 = vpop.f32.mrb[0].mxu0
        %v1767 = vpop.f32.mrb[0].mxu0
        %v1768 = vadd.f32 %v1479, %v1767
        %v1769 = vpop.f32.mrb[0].mxu0
        %1770 = vmatprep.mubr.bf16.mxu0 0
        %1771 = vmatmul.mubr.bf16.gmra.mrb[0].mxu0 %v1000
        %v1772 = vpop.f32.mrb[0].mxu0
        %v1773 = vadd.f32 %v1484, %v1772
        %v1774 = vpop.f32.mrb[0].mxu0
        %v1775 = vpop.f32.mrb[0].mxu0
        %v1776 = vadd.f32 %v1487, %v1775
        %v1777 = vpop.f32.mrb[0].mxu0
        %1778 = vmatprep.mubr.bf16.mxu0 0
        %1779 = vmatmul.mubr.bf16.gmra.mrb[0].mxu0 %v1003
        %v1780 = vpop.f32.mrb[0].mxu0
        %v1781 = vadd.f32 %v1492, %v1780
        %v1782 = vpop.f32.mrb[0].mxu0
        %v1783 = vpop.f32.mrb[0].mxu0
        %v1784 = vadd.f32 %v1495, %v1783
        %v1785 = vpop.f32.mrb[0].mxu0
        %1786 = vmatprep.mubr.bf16.mxu0 0
        %1787 = vmatmul.mubr.bf16.gmra.mrb[0].mxu0 %v1006
        %v1788 = vpop.f32.mrb[0].mxu0
        %v1789 = vadd.f32 %v1500, %v1788
        %v1790 = vpop.f32.mrb[0].mxu0
        %v1791 = vpop.f32.mrb[0].mxu0
        %v1792 = vadd.f32 %v1503, %v1791
        %v1793 = vpop.f32.mrb[0].mxu0
        %1794 = vmatprep.mubr.bf16.mxu0 0
        %1795 = vmatmul.mubr.bf16.gmra.mrb[0].mxu0 %v1009
        %v1796 = vpop.f32.mrb[0].mxu0
        %v1797 = vadd.f32 %v1508, %v1796
        %v1798 = vpop.f32.mrb[0].mxu0
        %v1799 = vpop.f32.mrb[0].mxu0
        %v1800 = vadd.f32 %v1511, %v1799
        %v1801 = vpop.f32.mrb[0].mxu0
        %1802 = vmatprep.mubr.bf16.mxu0 0
        %1803 = vmatmul.mubr.bf16.gmra.mrb[0].mxu0 %v1012
        %v1804 = vpop.f32.mrb[0].mxu0
        %v1805 = vadd.f32 %v1516, %v1804
        %v1806 = vpop.f32.mrb[0].mxu0
        %v1807 = vpop.f32.mrb[0].mxu0
        %v1808 = vadd.f32 %v1519, %v1807
        %v1809 = vpop.f32.mrb[0].mxu0
        %1810 = vmatprep.mubr.bf16.mxu0 0
        %1811 = vmatmul.mubr.bf16.gmra.mrb[0].mxu0 %v1015
        %v1812 = vpop.f32.mrb[0].mxu0
        %v1813 = vadd.f32 %v1524, %v1812
        %v1814 = vpop.f32.mrb[0].mxu0
        %v1815 = vpop.f32.mrb[0].mxu0
        %v1816 = vadd.f32 %v1527, %v1815
        %v1817 = vpop.f32.mrb[0].mxu0
        %1818 = vmatprep.mubr.bf16.mxu0 0
        %1819 = vmatmul.mubr.bf16.gmra.mrb[0].mxu0 %v1018
        %v1820 = vpop.f32.mrb[0].mxu0
        %v1821 = vadd.f32 %v1532, %v1820
        %v1822 = vpop.f32.mrb[0].mxu0
        %v1823 = vpop.f32.mrb[0].mxu0
        %v1824 = vadd.f32 %v1535, %v1823
        %v1825 = vpop.f32.mrb[0].mxu0
        %1826 = vmatprep.mubr.bf16.mxu0 0
        %1827 = vmatmul.mubr.bf16.gmra.mrb[0].mxu0 %v1021
        %v1828 = vpop.f32.mrb[0].mxu0
        %v1829 = vadd.f32 %v1540, %v1828
        %v1830 = vpop.f32.mrb[0].mxu0
        %v1831 = vpop.f32.mrb[0].mxu0
        %v1832 = vadd.f32 %v1543, %v1831
        %v1833 = vpop.f32.mrb[0].mxu0
        %1834 = vmatprep.mubr.bf16.mxu0 0
        %1835 = vmatmul.mubr.bf16.gmra.mrb[0].mxu0 %v1024
        %v1836 = vpop.f32.mrb[0].mxu0
        %v1837 = vadd.f32 %v1548, %v1836
        %v1838 = vpop.f32.mrb[0].mxu0
        %v1839 = vpop.f32.mrb[0].mxu0
        %v1840 = vadd.f32 %v1551, %v1839
        %v1841 = vpop.f32.mrb[0].mxu0
        %1842 = vdwg.mxu0
        %v1843 = vadd.f32 %v369, %v1589
        %v1844 = vadd.f32 %v370, %v1592
        %v1845 = vadd.f32 %v371, %v1597
        %v1846 = vadd.f32 %v372, %v1600
        %v1847 = vadd.f32 %v373, %v1605
        %v1848 = vadd.f32 %v374, %v1608
        %v1849 = vadd.f32 %v375, %v1613
        %v1850 = vadd.f32 %v376, %v1616
        %v1851 = vadd.f32 %v377, %v1621
        %v1852 = vadd.f32 %v378, %v1624
        %v1853 = vadd.f32 %v379, %v1629
        %v1854 = vadd.f32 %v380, %v1632
        %v1855 = vadd.f32 %v381, %v1637
        %v1856 = vadd.f32 %v382, %v1640
        %v1857 = vadd.f32 %v383, %v1645
        %v1858 = vadd.f32 %v384, %v1648
        %v1859 = vadd.f32 %v385, %v1653
        %v1860 = vadd.f32 %v386, %v1656
        %v1861 = vadd.f32 %v387, %v1661
        %v1862 = vadd.f32 %v388, %v1664
        %v1863 = vadd.f32 %v389, %v1669
        %v1864 = vadd.f32 %v390, %v1672
        %v1865 = vadd.f32 %v391, %v1677
        %v1866 = vadd.f32 %v392, %v1680
        %v1867 = vadd.f32 %v393, %v1685
        %v1868 = vadd.f32 %v394, %v1688
        %v1869 = vadd.f32 %v395, %v1693
        %v1870 = vadd.f32 %v396, %v1696
        %v1871 = vadd.f32 %v397, %v1701
        %v1872 = vadd.f32 %v398, %v1704
        %v1873 = vadd.f32 %v399, %v1709
        %v1874 = vadd.f32 %v400, %v1712
        %v1875 = vadd.f32 %v401, %v1717
        %v1876 = vadd.f32 %v402, %v1720
        %v1877 = vadd.f32 %v403, %v1725
        %v1878 = vadd.f32 %v404, %v1728
        %v1879 = vadd.f32 %v405, %v1733
        %v1880 = vadd.f32 %v406, %v1736
        %v1881 = vadd.f32 %v407, %v1741
        %v1882 = vadd.f32 %v408, %v1744
        %v1883 = vadd.f32 %v409, %v1749
        %v1884 = vadd.f32 %v410, %v1752
        %v1885 = vadd.f32 %v411, %v1757
        %v1886 = vadd.f32 %v412, %v1760
        %v1887 = vadd.f32 %v413, %v1765
        %v1888 = vadd.f32 %v414, %v1768
        %v1889 = vadd.f32 %v415, %v1773
        %v1890 = vadd.f32 %v416, %v1776
        %v1891 = vadd.f32 %v417, %v1781
        %v1892 = vadd.f32 %v418, %v1784
        %v1893 = vadd.f32 %v419, %v1789
        %v1894 = vadd.f32 %v420, %v1792
        %v1895 = vadd.f32 %v421, %v1797
        %v1896 = vadd.f32 %v422, %v1800
        %v1897 = vadd.f32 %v423, %v1805
        %v1898 = vadd.f32 %v424, %v1808
        %v1899 = vadd.f32 %v425, %v1813
        %v1900 = vadd.f32 %v426, %v1816
        %v1901 = vadd.f32 %v427, %v1821
        %v1902 = vadd.f32 %v428, %v1824
        %v1903 = vadd.f32 %v429, %v1829
        %v1904 = vadd.f32 %v430, %v1832
        %v1905 = vadd.f32 %v431, %v1837
        %v1906 = vadd.f32 %v432, %v1840
        %1907 = vst [vmem:[#allocation2] sm:$0xff] %v1843
        %1908 = vst [vmem:[#allocation2 + $0x8] sm:$0xff] %v1844
        %1909 = vst [vmem:[#allocation2 + $0x10] sm:$0xff] %v1845
        %1910 = vst [vmem:[#allocation2 + $0x18] sm:$0xff] %v1846
        %1911 = vst [vmem:[#allocation2 + $0x20] sm:$0xff] %v1847
        %1912 = vst [vmem:[#allocation2 + $0x28] sm:$0xff] %v1848
        %1913 = vst [vmem:[#allocation2 + $0x30] sm:$0xff] %v1849
        %1914 = vst [vmem:[#allocation2 + $0x38] sm:$0xff] %v1850
        %1915 = vst [vmem:[#allocation2 + $0x40] sm:$0xff] %v1851
        %1916 = vst [vmem:[#allocation2 + $0x48] sm:$0xff] %v1852
        %1917 = vst [vmem:[#allocation2 + $0x50] sm:$0xff] %v1853
        %1918 = vst [vmem:[#allocation2 + $0x58] sm:$0xff] %v1854
        %1919 = vst [vmem:[#allocation2 + $0x60] sm:$0xff] %v1855
        %1920 = vst [vmem:[#allocation2 + $0x68] sm:$0xff] %v1856
        %1921 = vst [vmem:[#allocation2 + $0x70] sm:$0xff] %v1857
        %1922 = vst [vmem:[#allocation2 + $0x78] sm:$0xff] %v1858
        %1923 = vst [vmem:[#allocation2 + $0x80] sm:$0xff] %v1859
        %1924 = vst [vmem:[#allocation2 + $0x88] sm:$0xff] %v1860
        %1925 = vst [vmem:[#allocation2 + $0x90] sm:$0xff] %v1861
        %1926 = vst [vmem:[#allocation2 + $0x98] sm:$0xff] %v1862
        %1927 = vst [vmem:[#allocation2 + $0xa0] sm:$0xff] %v1863
        %1928 = vst [vmem:[#allocation2 + $0xa8] sm:$0xff] %v1864
        %1929 = vst [vmem:[#allocation2 + $0xb0] sm:$0xff] %v1865
        %1930 = vst [vmem:[#allocation2 + $0xb8] sm:$0xff] %v1866
        %1931 = vst [vmem:[#allocation2 + $0xc0] sm:$0xff] %v1867
        %1932 = vst [vmem:[#allocation2 + $0xc8] sm:$0xff] %v1868
        %1933 = vst [vmem:[#allocation2 + $0xd0] sm:$0xff] %v1869
        %1934 = vst [vmem:[#allocation2 + $0xd8] sm:$0xff] %v1870
        %1935 = vst [vmem:[#allocation2 + $0xe0] sm:$0xff] %v1871
        %1936 = vst [vmem:[#allocation2 + $0xe8] sm:$0xff] %v1872
        %1937 = vst [vmem:[#allocation2 + $0xf0] sm:$0xff] %v1873
        %1938 = vst [vmem:[#allocation2 + $0xf8] sm:$0xff] %v1874
        %1939 = vst [vmem:[#allocation2 + $0x100] sm:$0xff] %v1875
        %1940 = vst [vmem:[#allocation2 + $0x108] sm:$0xff] %v1876
        %1941 = vst [vmem:[#allocation2 + $0x110] sm:$0xff] %v1877
        %1942 = vst [vmem:[#allocation2 + $0x118] sm:$0xff] %v1878
        %1943 = vst [vmem:[#allocation2 + $0x120] sm:$0xff] %v1879
        %1944 = vst [vmem:[#allocation2 + $0x128] sm:$0xff] %v1880
        %1945 = vst [vmem:[#allocation2 + $0x130] sm:$0xff] %v1881
        %1946 = vst [vmem:[#allocation2 + $0x138] sm:$0xff] %v1882
        %1947 = vst [vmem:[#allocation2 + $0x140] sm:$0xff] %v1883
        %1948 = vst [vmem:[#allocation2 + $0x148] sm:$0xff] %v1884
        %1949 = vst [vmem:[#allocation2 + $0x150] sm:$0xff] %v1885
        %1950 = vst [vmem:[#allocation2 + $0x158] sm:$0xff] %v1886
        %1951 = vst [vmem:[#allocation2 + $0x160] sm:$0xff] %v1887
        %1952 = vst [vmem:[#allocation2 + $0x168] sm:$0xff] %v1888
        %1953 = vst [vmem:[#allocation2 + $0x170] sm:$0xff] %v1889
        %1954 = vst [vmem:[#allocation2 + $0x178] sm:$0xff] %v1890
        %1955 = vst [vmem:[#allocation2 + $0x180] sm:$0xff] %v1891
        %1956 = vst [vmem:[#allocation2 + $0x188] sm:$0xff] %v1892
        %1957 = vst [vmem:[#allocation2 + $0x190] sm:$0xff] %v1893
        %1958 = vst [vmem:[#allocation2 + $0x198] sm:$0xff] %v1894
        %1959 = vst [vmem:[#allocation2 + $0x1a0] sm:$0xff] %v1895
        %1960 = vst [vmem:[#allocation2 + $0x1a8] sm:$0xff] %v1896
        %1961 = vst [vmem:[#allocation2 + $0x1b0] sm:$0xff] %v1897
        %1962 = vst [vmem:[#allocation2 + $0x1b8] sm:$0xff] %v1898
        %1963 = vst [vmem:[#allocation2 + $0x1c0] sm:$0xff] %v1899
        %1964 = vst [vmem:[#allocation2 + $0x1c8] sm:$0xff] %v1900
        %1965 = vst [vmem:[#allocation2 + $0x1d0] sm:$0xff] %v1901
        %1966 = vst [vmem:[#allocation2 + $0x1d8] sm:$0xff] %v1902
        %1967 = vst [vmem:[#allocation2 + $0x1e0] sm:$0xff] %v1903
        %1968 = vst [vmem:[#allocation2 + $0x1e8] sm:$0xff] %v1904
        %1969 = vst [vmem:[#allocation2 + $0x1f0] sm:$0xff] %v1905
        %1970 = vst [vmem:[#allocation2 + $0x1f8] sm:$0xff] %v1906
        // Predicated region
        $region49: #{tpu_custom_call.1} parent=35 // pred_check
          %p1971 = pneg %p301
        $region50: #{tpu_custom_call.1} parent=35 // pred_check_branch
          %1973 = sbr.rel (%p1971) target = $region52
        $region51: #{tpu_custom_call.1} parent=35 // pred_region
          %v1974 = vld [vmem:[#allocation2] sm:$0xff]
          %v1975 = vld [vmem:[#allocation2 + $0x8] sm:$0xff]
          %v1976 = vld [vmem:[#allocation2 + $0x10] sm:$0xff]
          %v1977 = vld [vmem:[#allocation2 + $0x18] sm:$0xff]
          %v1978 = vld [vmem:[#allocation2 + $0x20] sm:$0xff]
          %v1979 = vld [vmem:[#allocation2 + $0x28] sm:$0xff]
          %v1980 = vld [vmem:[#allocation2 + $0x30] sm:$0xff]
          %v1981 = vld [vmem:[#allocation2 + $0x38] sm:$0xff]
          %v1982 = vld [vmem:[#allocation2 + $0x40] sm:$0xff]
          %v1983 = vld [vmem:[#allocation2 + $0x48] sm:$0xff]
          %v1984 = vld [vmem:[#allocation2 + $0x50] sm:$0xff]
          %v1985 = vld [vmem:[#allocation2 + $0x58] sm:$0xff]
          %v1986 = vld [vmem:[#allocation2 + $0x60] sm:$0xff]
          %v1987 = vld [vmem:[#allocation2 + $0x68] sm:$0xff]
          %v1988 = vld [vmem:[#allocation2 + $0x70] sm:$0xff]
          %v1989 = vld [vmem:[#allocation2 + $0x78] sm:$0xff]
          %v1990 = vld [vmem:[#allocation2 + $0x80] sm:$0xff]
          %v1991 = vld [vmem:[#allocation2 + $0x88] sm:$0xff]
          %v1992 = vld [vmem:[#allocation2 + $0x90] sm:$0xff]
          %v1993 = vld [vmem:[#allocation2 + $0x98] sm:$0xff]
          %v1994 = vld [vmem:[#allocation2 + $0xa0] sm:$0xff]
          %v1995 = vld [vmem:[#allocation2 + $0xa8] sm:$0xff]
          %v1996 = vld [vmem:[#allocation2 + $0xb0] sm:$0xff]
          %v1997 = vld [vmem:[#allocation2 + $0xb8] sm:$0xff]
          %v1998 = vld [vmem:[#allocation2 + $0xc0] sm:$0xff]
          %v1999 = vld [vmem:[#allocation2 + $0xc8] sm:$0xff]
          %v2000 = vld [vmem:[#allocation2 + $0xd0] sm:$0xff]
          %v2001 = vld [vmem:[#allocation2 + $0xd8] sm:$0xff]
          %v2002 = vld [vmem:[#allocation2 + $0xe0] sm:$0xff]
          %v2003 = vld [vmem:[#allocation2 + $0xe8] sm:$0xff]
          %v2004 = vld [vmem:[#allocation2 + $0xf0] sm:$0xff]
          %v2005 = vld [vmem:[#allocation2 + $0xf8] sm:$0xff]
          %v2006 = vld [vmem:[#allocation2 + $0x100] sm:$0xff]
          %v2007 = vld [vmem:[#allocation2 + $0x108] sm:$0xff]
          %v2008 = vld [vmem:[#allocation2 + $0x110] sm:$0xff]
          %v2009 = vld [vmem:[#allocation2 + $0x118] sm:$0xff]
          %v2010 = vld [vmem:[#allocation2 + $0x120] sm:$0xff]
          %v2011 = vld [vmem:[#allocation2 + $0x128] sm:$0xff]
          %v2012 = vld [vmem:[#allocation2 + $0x130] sm:$0xff]
          %v2013 = vld [vmem:[#allocation2 + $0x138] sm:$0xff]
          %v2014 = vld [vmem:[#allocation2 + $0x140] sm:$0xff]
          %v2015 = vld [vmem:[#allocation2 + $0x148] sm:$0xff]
          %v2016 = vld [vmem:[#allocation2 + $0x150] sm:$0xff]
          %v2017 = vld [vmem:[#allocation2 + $0x158] sm:$0xff]
          %v2018 = vld [vmem:[#allocation2 + $0x160] sm:$0xff]
          %v2019 = vld [vmem:[#allocation2 + $0x168] sm:$0xff]
          %v2020 = vld [vmem:[#allocation2 + $0x170] sm:$0xff]
          %v2021 = vld [vmem:[#allocation2 + $0x178] sm:$0xff]
          %v2022 = vld [vmem:[#allocation2 + $0x180] sm:$0xff]
          %v2023 = vld [vmem:[#allocation2 + $0x188] sm:$0xff]
          %v2024 = vld [vmem:[#allocation2 + $0x190] sm:$0xff]
          %v2025 = vld [vmem:[#allocation2 + $0x198] sm:$0xff]
          %v2026 = vld [vmem:[#allocation2 + $0x1a0] sm:$0xff]
          %v2027 = vld [vmem:[#allocation2 + $0x1a8] sm:$0xff]
          %v2028 = vld [vmem:[#allocation2 + $0x1b0] sm:$0xff]
          %v2029 = vld [vmem:[#allocation2 + $0x1b8] sm:$0xff]
          %v2030 = vld [vmem:[#allocation2 + $0x1c0] sm:$0xff]
          %v2031 = vld [vmem:[#allocation2 + $0x1c8] sm:$0xff]
          %v2032 = vld [vmem:[#allocation2 + $0x1d0] sm:$0xff]
          %v2033 = vld [vmem:[#allocation2 + $0x1d8] sm:$0xff]
          %v2034 = vld [vmem:[#allocation2 + $0x1e0] sm:$0xff]
          %v2035 = vld [vmem:[#allocation2 + $0x1e8] sm:$0xff]
          %v2036 = vld [vmem:[#allocation2 + $0x1f0] sm:$0xff]
          %v2037 = vld [vmem:[#allocation2 + $0x1f8] sm:$0xff]
          %v2038 = vld [vmem:[%s295] sm:$0x1]
          %v2040 = vlaneseq
          %v2041 = vshrl.u32 %v2040, 7
          %v2042 = vsub.s32 0, %v2041
          %v2043 = vrot.slane %v2038, %v2042
          %v2045 = vmul.f32 %v1974, %v2043
          %v2046 = vmul.f32 %v1975, %v2043
          %v2047 = vmul.f32 %v1976, %v2043
          %v2048 = vmul.f32 %v1977, %v2043
          %v2049 = vmul.f32 %v1978, %v2043
          %v2050 = vmul.f32 %v1979, %v2043
          %v2051 = vmul.f32 %v1980, %v2043
          %v2052 = vmul.f32 %v1981, %v2043
          %v2053 = vmul.f32 %v1982, %v2043
          %v2054 = vmul.f32 %v1983, %v2043
          %v2055 = vmul.f32 %v1984, %v2043
          %v2056 = vmul.f32 %v1985, %v2043
          %v2057 = vmul.f32 %v1986, %v2043
          %v2058 = vmul.f32 %v1987, %v2043
          %v2059 = vmul.f32 %v1988, %v2043
          %v2060 = vmul.f32 %v1989, %v2043
          %v2061 = vmul.f32 %v1990, %v2043
          %v2062 = vmul.f32 %v1991, %v2043
          %v2063 = vmul.f32 %v1992, %v2043
          %v2064 = vmul.f32 %v1993, %v2043
          %v2065 = vmul.f32 %v1994, %v2043
          %v2066 = vmul.f32 %v1995, %v2043
          %v2067 = vmul.f32 %v1996, %v2043
          %v2068 = vmul.f32 %v1997, %v2043
          %v2069 = vmul.f32 %v1998, %v2043
          %v2070 = vmul.f32 %v1999, %v2043
          %v2071 = vmul.f32 %v2000, %v2043
          %v2072 = vmul.f32 %v2001, %v2043
          %v2073 = vmul.f32 %v2002, %v2043
          %v2074 = vmul.f32 %v2003, %v2043
          %v2075 = vmul.f32 %v2004, %v2043
          %v2076 = vmul.f32 %v2005, %v2043
          %v2077 = vmul.f32 %v2006, %v2043
          %v2078 = vmul.f32 %v2007, %v2043
          %v2079 = vmul.f32 %v2008, %v2043
          %v2080 = vmul.f32 %v2009, %v2043
          %v2081 = vmul.f32 %v2010, %v2043
          %v2082 = vmul.f32 %v2011, %v2043
          %v2083 = vmul.f32 %v2012, %v2043
          %v2084 = vmul.f32 %v2013, %v2043
          %v2085 = vmul.f32 %v2014, %v2043
          %v2086 = vmul.f32 %v2015, %v2043
          %v2087 = vmul.f32 %v2016, %v2043
          %v2088 = vmul.f32 %v2017, %v2043
          %v2089 = vmul.f32 %v2018, %v2043
          %v2090 = vmul.f32 %v2019, %v2043
          %v2091 = vmul.f32 %v2020, %v2043
          %v2092 = vmul.f32 %v2021, %v2043
          %v2093 = vmul.f32 %v2022, %v2043
          %v2094 = vmul.f32 %v2023, %v2043
          %v2095 = vmul.f32 %v2024, %v2043
          %v2096 = vmul.f32 %v2025, %v2043
          %v2097 = vmul.f32 %v2026, %v2043
          %v2098 = vmul.f32 %v2027, %v2043
          %v2099 = vmul.f32 %v2028, %v2043
          %v2100 = vmul.f32 %v2029, %v2043
          %v2101 = vmul.f32 %v2030, %v2043
          %v2102 = vmul.f32 %v2031, %v2043
          %v2103 = vmul.f32 %v2032, %v2043
          %v2104 = vmul.f32 %v2033, %v2043
          %v2105 = vmul.f32 %v2034, %v2043
          %v2106 = vmul.f32 %v2035, %v2043
          %v2107 = vmul.f32 %v2036, %v2043
          %v2108 = vmul.f32 %v2037, %v2043
          %v2109 = vld [vmem:[%s298] sm:$0x1]
          %v2111 = vlaneseq
          %v2112 = vshrl.u32 %v2111, 7
          %v2113 = vsub.s32 0, %v2112
          %v2114 = vrot.slane %v2109, %v2113
          %v2116 = vadd.f32 %v2045, %v2114
          %v2117 = vadd.f32 %v2046, %v2114
          %v2118 = vadd.f32 %v2047, %v2114
          %v2119 = vadd.f32 %v2048, %v2114
          %v2120 = vadd.f32 %v2049, %v2114
          %v2121 = vadd.f32 %v2050, %v2114
          %v2122 = vadd.f32 %v2051, %v2114
          %v2123 = vadd.f32 %v2052, %v2114
          %v2124 = vadd.f32 %v2053, %v2114
          %v2125 = vadd.f32 %v2054, %v2114
          %v2126 = vadd.f32 %v2055, %v2114
          %v2127 = vadd.f32 %v2056, %v2114
          %v2128 = vadd.f32 %v2057, %v2114
          %v2129 = vadd.f32 %v2058, %v2114
          %v2130 = vadd.f32 %v2059, %v2114
          %v2131 = vadd.f32 %v2060, %v2114
          %v2132 = vadd.f32 %v2061, %v2114
          %v2133 = vadd.f32 %v2062, %v2114
          %v2134 = vadd.f32 %v2063, %v2114
          %v2135 = vadd.f32 %v2064, %v2114
          %v2136 = vadd.f32 %v2065, %v2114
          %v2137 = vadd.f32 %v2066, %v2114
          %v2138 = vadd.f32 %v2067, %v2114
          %v2139 = vadd.f32 %v2068, %v2114
          %v2140 = vadd.f32 %v2069, %v2114
          %v2141 = vadd.f32 %v2070, %v2114
          %v2142 = vadd.f32 %v2071, %v2114
          %v2143 = vadd.f32 %v2072, %v2114
          %v2144 = vadd.f32 %v2073, %v2114
          %v2145 = vadd.f32 %v2074, %v2114
          %v2146 = vadd.f32 %v2075, %v2114
          %v2147 = vadd.f32 %v2076, %v2114
          %v2148 = vadd.f32 %v2077, %v2114
          %v2149 = vadd.f32 %v2078, %v2114
          %v2150 = vadd.f32 %v2079, %v2114
          %v2151 = vadd.f32 %v2080, %v2114
          %v2152 = vadd.f32 %v2081, %v2114
          %v2153 = vadd.f32 %v2082, %v2114
          %v2154 = vadd.f32 %v2083, %v2114
          %v2155 = vadd.f32 %v2084, %v2114
          %v2156 = vadd.f32 %v2085, %v2114
          %v2157 = vadd.f32 %v2086, %v2114
          %v2158 = vadd.f32 %v2087, %v2114
          %v2159 = vadd.f32 %v2088, %v2114
          %v2160 = vadd.f32 %v2089, %v2114
          %v2161 = vadd.f32 %v2090, %v2114
          %v2162 = vadd.f32 %v2091, %v2114
          %v2163 = vadd.f32 %v2092, %v2114
          %v2164 = vadd.f32 %v2093, %v2114
          %v2165 = vadd.f32 %v2094, %v2114
          %v2166 = vadd.f32 %v2095, %v2114
          %v2167 = vadd.f32 %v2096, %v2114
          %v2168 = vadd.f32 %v2097, %v2114
          %v2169 = vadd.f32 %v2098, %v2114
          %v2170 = vadd.f32 %v2099, %v2114
          %v2171 = vadd.f32 %v2100, %v2114
          %v2172 = vadd.f32 %v2101, %v2114
          %v2173 = vadd.f32 %v2102, %v2114
          %v2174 = vadd.f32 %v2103, %v2114
          %v2175 = vadd.f32 %v2104, %v2114
          %v2176 = vadd.f32 %v2105, %v2114
          %v2177 = vadd.f32 %v2106, %v2114
          %v2178 = vadd.f32 %v2107, %v2114
          %v2179 = vadd.f32 %v2108, %v2114
          %v2180 = vmax.f32 %v2116, 0.0
          %v2181 = vmax.f32 %v2117, 0.0
          %v2182 = vmax.f32 %v2118, 0.0
          %v2183 = vmax.f32 %v2119, 0.0
          %v2184 = vmax.f32 %v2120, 0.0
          %v2185 = vmax.f32 %v2121, 0.0
          %v2186 = vmax.f32 %v2122, 0.0
          %v2187 = vmax.f32 %v2123, 0.0
          %v2188 = vmax.f32 %v2124, 0.0
          %v2189 = vmax.f32 %v2125, 0.0
          %v2190 = vmax.f32 %v2126, 0.0
          %v2191 = vmax.f32 %v2127, 0.0
          %v2192 = vmax.f32 %v2128, 0.0
          %v2193 = vmax.f32 %v2129, 0.0
          %v2194 = vmax.f32 %v2130, 0.0
          %v2195 = vmax.f32 %v2131, 0.0
          %v2196 = vmax.f32 %v2132, 0.0
          %v2197 = vmax.f32 %v2133, 0.0
          %v2198 = vmax.f32 %v2134, 0.0
          %v2199 = vmax.f32 %v2135, 0.0
          %v2200 = vmax.f32 %v2136, 0.0
          %v2201 = vmax.f32 %v2137, 0.0
          %v2202 = vmax.f32 %v2138, 0.0
          %v2203 = vmax.f32 %v2139, 0.0
          %v2204 = vmax.f32 %v2140, 0.0
          %v2205 = vmax.f32 %v2141, 0.0
          %v2206 = vmax.f32 %v2142, 0.0
          %v2207 = vmax.f32 %v2143, 0.0
          %v2208 = vmax.f32 %v2144, 0.0
          %v2209 = vmax.f32 %v2145, 0.0
          %v2210 = vmax.f32 %v2146, 0.0
          %v2211 = vmax.f32 %v2147, 0.0
          %v2212 = vmax.f32 %v2148, 0.0
          %v2213 = vmax.f32 %v2149, 0.0
          %v2214 = vmax.f32 %v2150, 0.0
          %v2215 = vmax.f32 %v2151, 0.0
          %v2216 = vmax.f32 %v2152, 0.0
          %v2217 = vmax.f32 %v2153, 0.0
          %v2218 = vmax.f32 %v2154, 0.0
          %v2219 = vmax.f32 %v2155, 0.0
          %v2220 = vmax.f32 %v2156, 0.0
          %v2221 = vmax.f32 %v2157, 0.0
          %v2222 = vmax.f32 %v2158, 0.0
          %v2223 = vmax.f32 %v2159, 0.0
          %v2224 = vmax.f32 %v2160, 0.0
          %v2225 = vmax.f32 %v2161, 0.0
          %v2226 = vmax.f32 %v2162, 0.0
          %v2227 = vmax.f32 %v2163, 0.0
          %v2228 = vmax.f32 %v2164, 0.0
          %v2229 = vmax.f32 %v2165, 0.0
          %v2230 = vmax.f32 %v2166, 0.0
          %v2231 = vmax.f32 %v2167, 0.0
          %v2232 = vmax.f32 %v2168, 0.0
          %v2233 = vmax.f32 %v2169, 0.0
          %v2234 = vmax.f32 %v2170, 0.0
          %v2235 = vmax.f32 %v2171, 0.0
          %v2236 = vmax.f32 %v2172, 0.0
          %v2237 = vmax.f32 %v2173, 0.0
          %v2238 = vmax.f32 %v2174, 0.0
          %v2239 = vmax.f32 %v2175, 0.0
          %v2240 = vmax.f32 %v2176, 0.0
          %v2241 = vmax.f32 %v2177, 0.0
          %v2242 = vmax.f32 %v2178, 0.0
          %v2243 = vmax.f32 %v2179, 0.0
          %v2244 = vpack.c.bf16 %v2181, %v2180
          %v2245 = vpack.c.bf16 %v2183, %v2182
          %v2246 = vpack.c.bf16 %v2185, %v2184
          %v2247 = vpack.c.bf16 %v2187, %v2186
          %v2248 = vpack.c.bf16 %v2189, %v2188
          %v2249 = vpack.c.bf16 %v2191, %v2190
          %v2250 = vpack.c.bf16 %v2193, %v2192
          %v2251 = vpack.c.bf16 %v2195, %v2194
          %v2252 = vpack.c.bf16 %v2197, %v2196
          %v2253 = vpack.c.bf16 %v2199, %v2198
          %v2254 = vpack.c.bf16 %v2201, %v2200
          %v2255 = vpack.c.bf16 %v2203, %v2202
          %v2256 = vpack.c.bf16 %v2205, %v2204
          %v2257 = vpack.c.bf16 %v2207, %v2206
          %v2258 = vpack.c.bf16 %v2209, %v2208
          %v2259 = vpack.c.bf16 %v2211, %v2210
          %v2260 = vpack.c.bf16 %v2213, %v2212
          %v2261 = vpack.c.bf16 %v2215, %v2214
          %v2262 = vpack.c.bf16 %v2217, %v2216
          %v2263 = vpack.c.bf16 %v2219, %v2218
          %v2264 = vpack.c.bf16 %v2221, %v2220
          %v2265 = vpack.c.bf16 %v2223, %v2222
          %v2266 = vpack.c.bf16 %v2225, %v2224
          %v2267 = vpack.c.bf16 %v2227, %v2226
          %v2268 = vpack.c.bf16 %v2229, %v2228
          %v2269 = vpack.c.bf16 %v2231, %v2230
          %v2270 = vpack.c.bf16 %v2233, %v2232
          %v2271 = vpack.c.bf16 %v2235, %v2234
          %v2272 = vpack.c.bf16 %v2237, %v2236
          %v2273 = vpack.c.bf16 %v2239, %v2238
          %v2274 = vpack.c.bf16 %v2241, %v2240
          %v2275 = vpack.c.bf16 %v2243, %v2242
          %v2308 = vunpack.c.l.b16 %v2244
          %v2309 = vunpack.c.h.b16 %v2244
          %v2310 = vunpack.c.l.b16 %v2245
          %v2311 = vunpack.c.h.b16 %v2245
          %v2312 = vunpack.c.l.b16 %v2246
          %v2313 = vunpack.c.h.b16 %v2246
          %v2314 = vunpack.c.l.b16 %v2247
          %v2315 = vunpack.c.h.b16 %v2247
          %v2316 = vunpack.c.l.b16 %v2248
          %v2317 = vunpack.c.h.b16 %v2248
          %v2318 = vunpack.c.l.b16 %v2249
          %v2319 = vunpack.c.h.b16 %v2249
          %v2320 = vunpack.c.l.b16 %v2250
          %v2321 = vunpack.c.h.b16 %v2250
          %v2322 = vunpack.c.l.b16 %v2251
          %v2323 = vunpack.c.h.b16 %v2251
          %v2324 = vunpack.c.l.b16 %v2252
          %v2325 = vunpack.c.h.b16 %v2252
          %v2326 = vunpack.c.l.b16 %v2253
          %v2327 = vunpack.c.h.b16 %v2253
          %v2328 = vunpack.c.l.b16 %v2254
          %v2329 = vunpack.c.h.b16 %v2254
          %v2330 = vunpack.c.l.b16 %v2255
          %v2331 = vunpack.c.h.b16 %v2255
          %v2332 = vunpack.c.l.b16 %v2256
          %v2333 = vunpack.c.h.b16 %v2256
          %v2334 = vunpack.c.l.b16 %v2257
          %v2335 = vunpack.c.h.b16 %v2257
          %v2336 = vunpack.c.l.b16 %v2258
          %v2337 = vunpack.c.h.b16 %v2258
          %v2338 = vunpack.c.l.b16 %v2259
          %v2339 = vunpack.c.h.b16 %v2259
          %v2340 = vunpack.c.l.b16 %v2260
          %v2341 = vunpack.c.h.b16 %v2260
          %v2342 = vunpack.c.l.b16 %v2261
          %v2343 = vunpack.c.h.b16 %v2261
          %v2344 = vunpack.c.l.b16 %v2262
          %v2345 = vunpack.c.h.b16 %v2262
          %v2346 = vunpack.c.l.b16 %v2263
          %v2347 = vunpack.c.h.b16 %v2263
          %v2348 = vunpack.c.l.b16 %v2264
          %v2349 = vunpack.c.h.b16 %v2264
          %v2350 = vunpack.c.l.b16 %v2265
          %v2351 = vunpack.c.h.b16 %v2265
          %v2352 = vunpack.c.l.b16 %v2266
          %v2353 = vunpack.c.h.b16 %v2266
          %v2354 = vunpack.c.l.b16 %v2267
          %v2355 = vunpack.c.h.b16 %v2267
          %v2356 = vunpack.c.l.b16 %v2268
          %v2357 = vunpack.c.h.b16 %v2268
          %v2358 = vunpack.c.l.b16 %v2269
          %v2359 = vunpack.c.h.b16 %v2269
          %v2360 = vunpack.c.l.b16 %v2270
          %v2361 = vunpack.c.h.b16 %v2270
          %v2362 = vunpack.c.l.b16 %v2271
          %v2363 = vunpack.c.h.b16 %v2271
          %v2364 = vunpack.c.l.b16 %v2272
          %v2365 = vunpack.c.h.b16 %v2272
          %v2366 = vunpack.c.l.b16 %v2273
          %v2367 = vunpack.c.h.b16 %v2273
          %v2368 = vunpack.c.l.b16 %v2274
          %v2369 = vunpack.c.h.b16 %v2274
          %v2370 = vunpack.c.l.b16 %v2275
          %v2371 = vunpack.c.h.b16 %v2275
          %v2372 = vpack.c.b16 %v2308, %v2308
          %v2373 = vpack.c.b16 %v2309, %v2309
          %v2374 = vpack.c.b16 %v2310, %v2310
          %v2375 = vpack.c.b16 %v2311, %v2311
          %v2376 = vpack.c.b16 %v2312, %v2312
          %v2377 = vpack.c.b16 %v2313, %v2313
          %v2378 = vpack.c.b16 %v2314, %v2314
          %v2379 = vpack.c.b16 %v2315, %v2315
          %v2380 = vpack.c.b16 %v2316, %v2316
          %v2381 = vpack.c.b16 %v2317, %v2317
          %v2382 = vpack.c.b16 %v2318, %v2318
          %v2383 = vpack.c.b16 %v2319, %v2319
          %v2384 = vpack.c.b16 %v2320, %v2320
          %v2385 = vpack.c.b16 %v2321, %v2321
          %v2386 = vpack.c.b16 %v2322, %v2322
          %v2387 = vpack.c.b16 %v2323, %v2323
          %v2388 = vpack.c.b16 %v2324, %v2324
          %v2389 = vpack.c.b16 %v2325, %v2325
          %v2390 = vpack.c.b16 %v2326, %v2326
          %v2391 = vpack.c.b16 %v2327, %v2327
          %v2392 = vpack.c.b16 %v2328, %v2328
          %v2393 = vpack.c.b16 %v2329, %v2329
          %v2394 = vpack.c.b16 %v2330, %v2330
          %v2395 = vpack.c.b16 %v2331, %v2331
          %v2396 = vpack.c.b16 %v2332, %v2332
          %v2397 = vpack.c.b16 %v2333, %v2333
          %v2398 = vpack.c.b16 %v2334, %v2334
          %v2399 = vpack.c.b16 %v2335, %v2335
          %v2400 = vpack.c.b16 %v2336, %v2336
          %v2401 = vpack.c.b16 %v2337, %v2337
          %v2402 = vpack.c.b16 %v2338, %v2338
          %v2403 = vpack.c.b16 %v2339, %v2339
          %v2404 = vpack.c.b16 %v2340, %v2340
          %v2405 = vpack.c.b16 %v2341, %v2341
          %v2406 = vpack.c.b16 %v2342, %v2342
          %v2407 = vpack.c.b16 %v2343, %v2343
          %v2408 = vpack.c.b16 %v2344, %v2344
          %v2409 = vpack.c.b16 %v2345, %v2345
          %v2410 = vpack.c.b16 %v2346, %v2346
          %v2411 = vpack.c.b16 %v2347, %v2347
          %v2412 = vpack.c.b16 %v2348, %v2348
          %v2413 = vpack.c.b16 %v2349, %v2349
          %v2414 = vpack.c.b16 %v2350, %v2350
          %v2415 = vpack.c.b16 %v2351, %v2351
          %v2416 = vpack.c.b16 %v2352, %v2352
          %v2417 = vpack.c.b16 %v2353, %v2353
          %v2418 = vpack.c.b16 %v2354, %v2354
          %v2419 = vpack.c.b16 %v2355, %v2355
          %v2420 = vpack.c.b16 %v2356, %v2356
          %v2421 = vpack.c.b16 %v2357, %v2357
          %v2422 = vpack.c.b16 %v2358, %v2358
          %v2423 = vpack.c.b16 %v2359, %v2359
          %v2424 = vpack.c.b16 %v2360, %v2360
          %v2425 = vpack.c.b16 %v2361, %v2361
          %v2426 = vpack.c.b16 %v2362, %v2362
          %v2427 = vpack.c.b16 %v2363, %v2363
          %v2428 = vpack.c.b16 %v2364, %v2364
          %v2429 = vpack.c.b16 %v2365, %v2365
          %v2430 = vpack.c.b16 %v2366, %v2366
          %v2431 = vpack.c.b16 %v2367, %v2367
          %v2432 = vpack.c.b16 %v2368, %v2368
          %v2433 = vpack.c.b16 %v2369, %v2369
          %v2434 = vpack.c.b16 %v2370, %v2370
          %v2435 = vpack.c.b16 %v2371, %v2371
          %2500 = vst [vmem:[%s289] sm:$0xf] %v2372
          %2501 = vst [vmem:[%s289 + $0x4] sm:$0xf] %v2373
          %2502 = vst [vmem:[%s289 + $0x8] sm:$0xf] %v2374
          %2503 = vst [vmem:[%s289 + $0xc] sm:$0xf] %v2375
          %2504 = vst [vmem:[%s289 + $0x10] sm:$0xf] %v2376
          %2505 = vst [vmem:[%s289 + $0x14] sm:$0xf] %v2377
          %2506 = vst [vmem:[%s289 + $0x18] sm:$0xf] %v2378
          %2507 = vst [vmem:[%s289 + $0x1c] sm:$0xf] %v2379
          %2508 = vst [vmem:[%s289 + $0x20] sm:$0xf] %v2380
          %2509 = vst [vmem:[%s289 + $0x24] sm:$0xf] %v2381
          %2510 = vst [vmem:[%s289 + $0x28] sm:$0xf] %v2382
          %2511 = vst [vmem:[%s289 + $0x2c] sm:$0xf] %v2383
          %2512 = vst [vmem:[%s289 + $0x30] sm:$0xf] %v2384
          %2513 = vst [vmem:[%s289 + $0x34] sm:$0xf] %v2385
          %2514 = vst [vmem:[%s289 + $0x38] sm:$0xf] %v2386
          %2515 = vst [vmem:[%s289 + $0x3c] sm:$0xf] %v2387
          %2516 = vst [vmem:[%s289 + $0x40] sm:$0xf] %v2388
          %2517 = vst [vmem:[%s289 + $0x44] sm:$0xf] %v2389
          %2518 = vst [vmem:[%s289 + $0x48] sm:$0xf] %v2390
          %2519 = vst [vmem:[%s289 + $0x4c] sm:$0xf] %v2391
          %2520 = vst [vmem:[%s289 + $0x50] sm:$0xf] %v2392
          %2521 = vst [vmem:[%s289 + $0x54] sm:$0xf] %v2393
          %2522 = vst [vmem:[%s289 + $0x58] sm:$0xf] %v2394
          %2523 = vst [vmem:[%s289 + $0x5c] sm:$0xf] %v2395
          %2524 = vst [vmem:[%s289 + $0x60] sm:$0xf] %v2396
          %2525 = vst [vmem:[%s289 + $0x64] sm:$0xf] %v2397
          %2526 = vst [vmem:[%s289 + $0x68] sm:$0xf] %v2398
          %2527 = vst [vmem:[%s289 + $0x6c] sm:$0xf] %v2399
          %2528 = vst [vmem:[%s289 + $0x70] sm:$0xf] %v2400
          %2529 = vst [vmem:[%s289 + $0x74] sm:$0xf] %v2401
          %2530 = vst [vmem:[%s289 + $0x78] sm:$0xf] %v2402
          %2531 = vst [vmem:[%s289 + $0x7c] sm:$0xf] %v2403
          %2532 = vst [vmem:[%s289 + $0x80] sm:$0xf] %v2404
          %2533 = vst [vmem:[%s289 + $0x84] sm:$0xf] %v2405
          %2534 = vst [vmem:[%s289 + $0x88] sm:$0xf] %v2406
          %2535 = vst [vmem:[%s289 + $0x8c] sm:$0xf] %v2407
          %2536 = vst [vmem:[%s289 + $0x90] sm:$0xf] %v2408
          %2537 = vst [vmem:[%s289 + $0x94] sm:$0xf] %v2409
          %2538 = vst [vmem:[%s289 + $0x98] sm:$0xf] %v2410
          %2539 = vst [vmem:[%s289 + $0x9c] sm:$0xf] %v2411
          %2540 = vst [vmem:[%s289 + $0xa0] sm:$0xf] %v2412
          %2541 = vst [vmem:[%s289 + $0xa4] sm:$0xf] %v2413
          %2542 = vst [vmem:[%s289 + $0xa8] sm:$0xf] %v2414
          %2543 = vst [vmem:[%s289 + $0xac] sm:$0xf] %v2415
          %2544 = vst [vmem:[%s289 + $0xb0] sm:$0xf] %v2416
          %2545 = vst [vmem:[%s289 + $0xb4] sm:$0xf] %v2417
          %2546 = vst [vmem:[%s289 + $0xb8] sm:$0xf] %v2418
          %2547 = vst [vmem:[%s289 + $0xbc] sm:$0xf] %v2419
          %2548 = vst [vmem:[%s289 + $0xc0] sm:$0xf] %v2420
          %2549 = vst [vmem:[%s289 + $0xc4] sm:$0xf] %v2421
          %2550 = vst [vmem:[%s289 + $0xc8] sm:$0xf] %v2422
          %2551 = vst [vmem:[%s289 + $0xcc] sm:$0xf] %v2423
          %2552 = vst [vmem:[%s289 + $0xd0] sm:$0xf] %v2424
          %2553 = vst [vmem:[%s289 + $0xd4] sm:$0xf] %v2425
          %2554 = vst [vmem:[%s289 + $0xd8] sm:$0xf] %v2426
          %2555 = vst [vmem:[%s289 + $0xdc] sm:$0xf] %v2427
          %2556 = vst [vmem:[%s289 + $0xe0] sm:$0xf] %v2428
          %2557 = vst [vmem:[%s289 + $0xe4] sm:$0xf] %v2429
          %2558 = vst [vmem:[%s289 + $0xe8] sm:$0xf] %v2430
          %2559 = vst [vmem:[%s289 + $0xec] sm:$0xf] %v2431
          %2560 = vst [vmem:[%s289 + $0xf0] sm:$0xf] %v2432
          %2561 = vst [vmem:[%s289 + $0xf4] sm:$0xf] %v2433
          %2562 = vst [vmem:[%s289 + $0xf8] sm:$0xf] %v2434
          %2563 = vst [vmem:[%s289 + $0xfc] sm:$0xf] %v2435
        $region52: #{tpu_custom_call.1} parent=35 // pred_fallthru
          _
        %s2564 = sand.u32 %s159, 1
        %s2565 = scalar_lea.sflag [#allocation5], %s2564
        %s2566 = sand.u32 %s159, 1
        %s2567 = smul.addr %s2566, 256
        %s2568 = scalar_lea.vmem [#allocation8], %s2567
        // Predicated region
        $region53: #{tpu_custom_call.1} parent=35 // pred_check
          %p2569 = pneg %p169
        $region54: #{tpu_custom_call.1} parent=35 // pred_check_branch
          %2571 = sbr.rel (%p2569) target = $region56
        $region55: #{tpu_custom_call.1} parent=35 // pred_region
          %s2572 = smul.u32 64, %s27
          %s2574 = ssub.s32 4096, 4096
          %2575 = vsyncadd %s2565, %s2574
          %s2576 = sadd.s32 %s28, %s2572
          %s2577 = smul.addr %s2576, 64
          %s2578 = scalar_lea.hbm %s4, %s2577
          %s2579 = sshll.u32 %s2568, 4
          %s2580 = int_to_ptr.vmem [resolvable:$true] %s2579
          %2585 = dma.vmem_to_hbm [thread:$0]  %s2580, 4096, %s2578, %s2565, 64, 64, 4
        $region56: #{tpu_custom_call.1} parent=35 // pred_fallthru
          _
      $region36: #{tpu_custom_call.1} parent=5 // pred_fallthru
        _
      %p2586 = scmp.le.s32.totalorder 2, %s17
      // Predicated region
      $region57: #{tpu_custom_call.1} parent=5 // pred_check
        %p2587 = pneg %p2586
      $region58: #{tpu_custom_call.1} parent=5 // pred_check_branch
        %2589 = sbr.rel (%p2587) target = $region60
      $region59: #{tpu_custom_call.1} parent=5 // pred_region
        %s2590 = ssub.s32 %s17, 2
        // Predicated region
        $region61: #{tpu_custom_call.1} parent=59 // pred_check
          %p2591 = pneg %p175
        $region62: #{tpu_custom_call.1} parent=59 // pred_check_branch
          %2593 = sbr.rel (%p2591) target = $region64
        $region63: #{tpu_custom_call.1} parent=59 // pred_region
          %s2594 = sand.u32 %s160, 1
          %s2595 = scalar_lea.sflag [#allocation5], %s2594
          %s2596 = sand.u32 %s160, 1
          %s2597 = smul.addr %s2596, 256
          %s2598 = scalar_lea.vmem [#allocation8], %s2597
          %2599 = dma.done %s2595, 4096
        $region64: #{tpu_custom_call.1} parent=59 // pred_fallthru
          _
      $region60: #{tpu_custom_call.1} parent=5 // pred_fallthru
        _
    $region6: #{tpu_custom_call.1} parent=1 // loop_footer
      %s21 = sadd.s32 1, %s17
    $region7: #{tpu_custom_call.1} parent=1 // loop_footer_branch
      %16 = sbr.rel target = $region3
    $region8: #{tpu_custom_call.1} parent=1 // loop_exit
      _
    %2600 = vsyncpa [#allocation4], 1
    %s2601 = scalar_lea.sflag [#allocation4], 1
    %2602 = vsyncpa %s2601, 1
    %2603 = vsyncpa [#allocation7], 1
    %2604 = vsyncpa [#allocation5], 1
    %s2605 = scalar_lea.sflag [#allocation5], 1
    %2606 = vsyncpa %s2605, 1

</llo_original>
